<compile_context>
chip_gen: v5e
topology: v5e:2x2
jax: 0.10.0
libtpu: 0.0.40
codegen_flags: <defaults>
</compile_context>

<pallas_src>
import math

import jax
import jax.numpy as jnp
from jax.experimental import pallas as pl
from jax.experimental.pallas import tpu as pltpu

# ---- scaled-down ViT-S/14 DINOv2 config (structure identical, sizes reduced) ----
PATCH = 14
IMG = 28                 # -> 2x2 = 4 patches per image
IN_CHANS = 3
EMBED_DIM = 64           # real model: 384
DEPTH = 2                # real model: 12
NUM_HEADS = 4            # real model: 6
HEAD_DIM = EMBED_DIM // NUM_HEADS
MLP_RATIO = 4
HIDDEN = EMBED_DIM * MLP_RATIO
LS_INIT = 1e-5           # DINOv2 LayerScale init value
LN_EPS = 1e-6            # timm ViT LayerNorm eps

NUM_PATCHES = (IMG // PATCH) ** 2          # 4
N_TOK = NUM_PATCHES + 1                    # 5  (CLS + patches)
N_PAD = ((N_TOK + 7) // 8) * 8             # 8  (tokens per image, sublane-aligned)
K_PATCH = IN_CHANS * PATCH * PATCH         # 588 (im2col width)
K_PAD = ((K_PATCH + 127) // 128) * 128     # 640 (lane-aligned im2col width)

# rows of the packed per-depth vector slab (DEPTH, VROWS, HIDDEN)
VROWS = 16
(R_LN1G, R_LN1B, R_QB, R_KB, R_VB, R_PROJB, R_LS1,
 R_LN2G, R_LN2B, R_FC1B, R_FC2B, R_LS2) = range(12)


# --------------------------------------------------------------------------------------
# in-kernel math helpers (plain jnp ops; traced inside the Pallas kernels)
# --------------------------------------------------------------------------------------
def _erf(x):
    # Abramowitz & Stegun 7.1.26 (|err| ~ 1.5e-7): matches torch.nn.GELU (exact erf)
    # to f32 precision using only ops with guaranteed Mosaic lowerings.
    p = 0.3275911
    a1, a2, a3, a4, a5 = 0.254829592, -0.284496736, 1.421413741, -1.453152027, 1.061405429
    ax = jnp.abs(x)
    t = 1.0 / (1.0 + p * ax)
    poly = ((((a5 * t + a4) * t + a3) * t + a2) * t + a1) * t
    y = 1.0 - poly * jnp.exp(-ax * ax)
    return jnp.where(x >= 0, y, -y)


def _layernorm(x, g, b):
    mu = jnp.mean(x, axis=-1, keepdims=True)
    xc = x - mu
    var = jnp.mean(xc * xc, axis=-1, keepdims=True)
    return xc * jax.lax.rsqrt(var + LN_EPS) * g + b


# --------------------------------------------------------------------------------------
# kernel 1: patch-embed (im2col matmul already in padded token layout) + cls/pos add
# --------------------------------------------------------------------------------------
def _embed_kernel(patches_ref, pw_ref, add_ref, tok_ref):
    # patches_ref: (N_PAD, K_PAD) f32 for one image (row 0 and pad rows are zero)
    # pw_ref:      (K_PAD, D)     bf16 patch-embed weight (K zero-padded)
    # add_ref:     (N_PAD, D)     f32: row0 = cls+pos[0]; rows1..4 = patch_b+pos[i]; else 0
    tok_ref[...] = (
        jnp.dot(patches_ref[...].astype(jnp.bfloat16), pw_ref[...],
                preferred_element_type=jnp.float32)
        + add_ref[...])


# --------------------------------------------------------------------------------------
# kernel 2: fused transformer blocks; grid=(B, DEPTH) -> per-image, per-block step
# --------------------------------------------------------------------------------------
def _block_kernel(tok_ref, vec_ref, qw_ref, kw_ref, vw_ref, pw_ref,
                  f1w_ref, f2w_ref, ng_ref, nb_ref,
                  out_ref, h_scr):
    d = pl.program_id(1)
    f32 = jnp.float32
    bf16 = jnp.bfloat16
    D = EMBED_DIM

    # first block of this image: load the token slab into the resident VMEM scratch
    @pl.when(d == 0)
    def _load():
        h_scr[...] = tok_ref[...]

    h = h_scr[...]

    # packed per-depth vectors
    vec = vec_ref[0]                                   # (VROWS, HIDDEN) f32
    row = lambda r, n=D: vec[r:r + 1, :n]              # (1, n)

    # ---- attention branch: LN -> q/k/v -> per-image, per-head MHSA -> proj -> LS res --
    y = _layernorm(h, row(R_LN1G), row(R_LN1B))
    yb = y.astype(bf16)
    q = (jnp.dot(yb, qw_ref[0], preferred_element_type=f32) + row(R_QB)) * (HEAD_DIM ** -0.5)
    k = jnp.dot(yb, kw_ref[0], preferred_element_type=f32) + row(R_KB)
    v = jnp.dot(yb, vw_ref[0], preferred_element_type=f32) + row(R_VB)

    # key-padding mask built in-kernel (no HBM-resident bias): only the N_TOK real keys
    col = jax.lax.broadcasted_iota(jnp.int32, (N_PAD, N_PAD), 1)
    kmask = jnp.where(col < N_TOK, jnp.float32(0.0), jnp.float32(-1e30))

    heads = []
    for hh in range(NUM_HEADS):                        # static unroll, static lane slices
        lo = hh * HEAD_DIM
        hi = lo + HEAD_DIM
        qh = q[:, lo:hi].astype(bf16)
        kh = k[:, lo:hi].astype(bf16)
        vh = v[:, lo:hi].astype(bf16)
        s = jax.lax.dot_general(qh, kh, (((1,), (1,)), ((), ())),
                                preferred_element_type=f32) + kmask
        s = s - jnp.max(s, axis=-1, keepdims=True)
        p = jnp.exp(s)
        p = p / jnp.sum(p, axis=-1, keepdims=True)     # exact divide (parity)
        heads.append(jnp.dot(p.astype(bf16), vh, preferred_element_type=f32))
    attn = jnp.concatenate(heads, axis=-1)             # (N_PAD, D)

    o = jnp.dot(attn.astype(bf16), pw_ref[0], preferred_element_type=f32) + row(R_PROJB)
    h = h + row(R_LS1) * o

    # ---- MLP branch: LN -> fc1 -> exact GELU -> fc2 -> LayerScale residual ------------
    y = _layernorm(h, row(R_LN2G), row(R_LN2B))
    m = jnp.dot(y.astype(bf16), f1w_ref[0], preferred_element_type=f32) + row(R_FC1B, HIDDEN)
    m = 0.5 * m * (1.0 + _erf(m * (1.0 / math.sqrt(2.0))))
    m = jnp.dot(m.astype(bf16), f2w_ref[0], preferred_element_type=f32) + row(R_FC2B)
    h = h + row(R_LS2) * m

    h_scr[...] = h

    # ---- last block: final LayerNorm, lane-dense slab store ---------------------------
    @pl.when(d == pl.num_programs(1) - 1)
    def _finalize():
        # TODO(synk): at real scale emit only the CLS row(s) to cut HBM writeback N_PAD x.
        out_ref[...] = _layernorm(h, ng_ref[...], nb_ref[...]).astype(out_ref.dtype)


# --------------------------------------------------------------------------------------
# forward wrapper (wrapper-side work is layout glue only: im2col + padding + add slab)
# --------------------------------------------------------------------------------------
def vit_forward(params, x):
    """x: [B, 3, H, W] (NCHW) -> CLS-token features [B, EMBED_DIM]."""
    B = x.shape[0]
    D = EMBED_DIM

    # im2col for the non-overlapping 14x14 patch conv (conv == matmul), pre-arranged into
    # the padded token layout: row 0 (CLS slot), rows 1..NUM_PATCHES (patches), pad rows 0.
    nh, nw = x.shape[2] // PATCH, x.shape[3] // PATCH
    p = x.reshape(B, IN_CHANS, nh, PATCH, nw, PATCH)
    p = p.transpose(0, 2, 4, 1, 3, 5).reshape(B, NUM_PATCHES, K_PATCH)
    patches = jnp.zeros((B, N_PAD, K_PAD), jnp.float32)
    patches = patches.at[:, 1:1 + NUM_PATCHES, :K_PATCH].set(p)
    patches = patches.reshape(B * N_PAD, K_PAD)

    # additive slab: CLS token + pos[0] in row 0, patch bias + pos[i] in patch rows.
    add = jnp.zeros((N_PAD, D), jnp.float32)
    add = add.at[0].set(params["cls_token"][0] + params["pos_embed"][0])
    add = add.at[1:N_TOK].set(params["patch_b"] + params["pos_embed"][1:N_TOK])

    # ---- kernel 1: patch embedding -----------------------------------------------------
    tokens = pl.pallas_call(
        _embed_kernel,
        out_shape=jax.ShapeDtypeStruct((B * N_PAD, D), jnp.float32),
        grid=(B,),
        in_specs=[
            pl.BlockSpec((N_PAD, K_PAD), lambda b: (b, 0)),
            pl.BlockSpec((K_PAD, D), lambda b: (0, 0)),
            pl.BlockSpec((N_PAD, D), lambda b: (0, 0)),
        ],
        out_specs=pl.BlockSpec((N_PAD, D), lambda b: (b, 0)),
        compiler_params=pltpu.CompilerParams(dimension_semantics=("parallel",)),
    )(patches, params["patch_w"], add)

    # ---- kernel 2: DEPTH transformer blocks, per-image VMEM-resident token slab --------
    per_depth_mat = lambda r, c: pl.BlockSpec((1, r, c), lambda b, d: (d, 0, 0))
    per_image = pl.BlockSpec((N_PAD, D), lambda b, d: (b, 0))
    shared_vec = pl.BlockSpec((1, D), lambda b, d: (0, 0))

    out2d = pl.pallas_call(
        _block_kernel,
        out_shape=jax.ShapeDtypeStruct((B * N_PAD, D), jnp.float32),
        grid=(B, DEPTH),
        in_specs=[
            per_image,                              # tokens
            per_depth_mat(VROWS, HIDDEN),           # packed per-depth vectors (f32)
            per_depth_mat(D, D),                    # q_w  (bf16)
            per_depth_mat(D, D),                    # k_w  (bf16)
            per_depth_mat(D, D),                    # v_w  (bf16)
            per_depth_mat(D, D),                    # proj_w (bf16)
            per_depth_mat(D, HIDDEN),               # fc1_w (bf16)
            per_depth_mat(HIDDEN, D),               # fc2_w (bf16)
            shared_vec,                             # norm_g
            shared_vec,                             # norm_b
        ],
        out_specs=pl.BlockSpec((N_PAD, D), lambda b, d: (b, 0)),
        scratch_shapes=[pltpu.VMEM((N_PAD, D), jnp.float32)],   # resident token slab
        compiler_params=pltpu.CompilerParams(
            dimension_semantics=("parallel", "arbitrary"),
        ),
    )(
        tokens, params["vecs"],
        params["q_w"], params["k_w"], params["v_w"], params["proj_w"],
        params["fc1_w"], params["fc2_w"],
        params["norm_g"], params["norm_b"],
    )

    # CLS-token features (row 0 of each image's padded token block) == features[:, 0, :]
    return out2d.reshape(B, N_PAD, D)[:, 0, :]


# --------------------------------------------------------------------------------------
# deterministic synthetic parameters (no checkpoint loading)
# --------------------------------------------------------------------------------------
def init_params(key):
    def nrm(k, shape, std=0.02):
        return std * jax.random.normal(k, shape, dtype=jnp.float32)

    keys = jax.random.split(key, 10)
    D = EMBED_DIM
    bf16 = jnp.bfloat16

    pw = jnp.zeros((K_PAD, D), jnp.float32)
    pw = pw.at[:K_PATCH, :].set(nrm(keys[0], (K_PATCH, D)))

    # packed per-depth vector slab: LN gammas = 1, LayerScale = LS_INIT, biases = 0
    vecs = jnp.zeros((DEPTH, VROWS, HIDDEN), jnp.float32)
    vecs = vecs.at[:, R_LN1G, :D].set(1.0)
    vecs = vecs.at[:, R_LN2G, :D].set(1.0)
    vecs = vecs.at[:, R_LS1, :D].set(LS_INIT)
    vecs = vecs.at[:, R_LS2, :D].set(LS_INIT)

    return {
        # patch embed + tokenization
        "patch_w": pw.astype(bf16),
        "patch_b": jnp.zeros((D,), jnp.float32),
        "cls_token": nrm(keys[1], (1, D)),
        "pos_embed": nrm(keys[2], (N_TOK, D)),
        # final norm
        "norm_g": jnp.ones((1, D), jnp.float32),
        "norm_b": jnp.zeros((1, D), jnp.float32),
        # per-block weight matrices stacked on a leading DEPTH axis (bf16 in HBM)
        "q_w": nrm(keys[3], (DEPTH, D, D)).astype(bf16),
        "k_w": nrm(keys[4], (DEPTH, D, D)).astype(bf16),
        "v_w": nrm(keys[5], (DEPTH, D, D)).astype(bf16),
        "proj_w": nrm(keys[6], (DEPTH, D, D)).astype(bf16),
        "fc1_w": nrm(keys[7], (DEPTH, D, HIDDEN)).astype(bf16),
        "fc2_w": nrm(keys[8], (DEPTH, HIDDEN, D)).astype(bf16),
        # packed per-block vectors (LN g/b, q/k/v/proj/fc1/fc2 biases, LayerScale)
        "vecs": vecs,
    }


if __name__ == "__main__":
    key = jax.random.PRNGKey(0)
    pkey, xkey = jax.random.split(key)
    params = init_params(pkey)
    # input consistent with the module's forward: [B, 3, H, W], single patch at a time
    x = jax.random.normal(xkey, (2, IN_CHANS, IMG, IMG), dtype=jnp.float32)

    fwd = jax.jit(vit_forward)
    feats = fwd(params, x)
    jax.block_until_ready(feats)
    assert feats.shape == (2, EMBED_DIM) and feats.dtype == jnp.float32
    print("KERNEL_OK")
</pallas_src>

<mosaic_0001>
module attributes {stable_mosaic.version = 11 : i64} {
  func.func @_embed_kernel(%arg0: i32, %arg1: memref<8x640xf32, #tpu.memory_space<vmem>>, %arg2: memref<640x64xbf16, #tpu.memory_space<vmem>>, %arg3: memref<8x64xf32, #tpu.memory_space<vmem>>, %arg4: memref<8x64xf32, #tpu.memory_space<vmem>>) attributes {dimension_semantics = [#tpu.dimension_semantics<parallel>], iteration_bounds = array<i64: 2>, scalar_prefetch = 0 : i64, scratch_operands = 0 : i64, tpu.core_type = #tpu.core_type<tc>, window_params = [{transform_indices = @transform_0, window_bounds = array<i64: 8, 640>}, {pipeline_mode = #tpu.pipeline_mode<synchronous>, transform_indices = @transform_1, window_bounds = array<i64: 640, 64>}, {pipeline_mode = #tpu.pipeline_mode<synchronous>, transform_indices = @transform_2, window_bounds = array<i64: 8, 64>}, {transform_indices = @transform_3, window_bounds = array<i64: 8, 64>}]} {
    %c0 = arith.constant 0 : index
    %c0_0 = arith.constant 0 : index
    %0 = vector.load %arg1[%c0, %c0_0] : memref<8x640xf32, #tpu.memory_space<vmem>>, vector<8x640xf32>
    %1 = arith.truncf %0 : vector<8x640xf32> to vector<8x640xbf16>
    %c0_1 = arith.constant 0 : index
    %c0_2 = arith.constant 0 : index
    %2 = vector.load %arg2[%c0_1, %c0_2] : memref<640x64xbf16, #tpu.memory_space<vmem>>, vector<640x64xbf16>
    %cst = arith.constant dense<0.000000e+00> : vector<8x64xf32>
    %3 = tpu.matmul %1, %2, %cst {dimension_numbers = #tpu.dot_dimension_numbers<[1], [0], [0], [1], [0, 0, 1, 1], [], []>} : vector<8x640xbf16>, vector<640x64xbf16>, vector<8x64xf32> -> vector<8x64xf32>
    %c0_3 = arith.constant 0 : index
    %c0_4 = arith.constant 0 : index
    %4 = vector.load %arg3[%c0_3, %c0_4] : memref<8x64xf32, #tpu.memory_space<vmem>>, vector<8x64xf32>
    %5 = arith.addf %3, %4 : vector<8x64xf32>
    %c0_5 = arith.constant 0 : index
    %c0_6 = arith.constant 0 : index
    %6 = vector.load %arg4[%c0_5, %c0_6] : memref<8x64xf32, #tpu.memory_space<vmem>>, vector<8x64xf32>
    tpu.vector_store %arg4[%c0_5, %c0_6], %5 {strides = array<i32>} : memref<8x64xf32, #tpu.memory_space<vmem>>, vector<8x64xf32>,
    return
  }
  func.func @transform_0(%arg0: i32) -> (i32, i32) {
    %c0_i32 = arith.constant 0 : i32
    %c0_i32_0 = arith.constant 0 : i32
    return %arg0, %c0_i32 : i32, i32
  }
  func.func @transform_1(%arg0: i32) -> (i32, i32) {
    %c0_i32 = arith.constant 0 : i32
    %c0_i32_0 = arith.constant 0 : i32
    %c0_i32_1 = arith.constant 0 : i32
    return %c0_i32, %c0_i32_0 : i32, i32
  }
  func.func @transform_2(%arg0: i32) -> (i32, i32) {
    %c0_i32 = arith.constant 0 : i32
    %c0_i32_0 = arith.constant 0 : i32
    %c0_i32_1 = arith.constant 0 : i32
    return %c0_i32, %c0_i32_0 : i32, i32
  }
  func.func @transform_3(%arg0: i32) -> (i32, i32) {
    %c0_i32 = arith.constant 0 : i32
    %c0_i32_0 = arith.constant 0 : i32
    return %arg0, %c0_i32 : i32, i32
  }
}

module attributes {stable_mosaic.version = 11 : i64} {
  func.func @_block_kernel(%arg0: i32, %arg1: i32, %arg2: memref<8x64xf32, #tpu.memory_space<vmem>>, %arg3: memref<1x16x256xf32, #tpu.memory_space<vmem>>, %arg4: memref<1x64x64xbf16, #tpu.memory_space<vmem>>, %arg5: memref<1x64x64xbf16, #tpu.memory_space<vmem>>, %arg6: memref<1x64x64xbf16, #tpu.memory_space<vmem>>, %arg7: memref<1x64x64xbf16, #tpu.memory_space<vmem>>, %arg8: memref<1x64x256xbf16, #tpu.memory_space<vmem>>, %arg9: memref<1x256x64xbf16, #tpu.memory_space<vmem>>, %arg10: memref<1x64xf32, #tpu.memory_space<vmem>>, %arg11: memref<1x64xf32, #tpu.memory_space<vmem>>, %arg12: memref<8x64xf32, #tpu.memory_space<vmem>>, %arg13: memref<8x64xf32, #tpu.memory_space<vmem>>) attributes {dimension_semantics = [#tpu.dimension_semantics<parallel>, #tpu.dimension_semantics<arbitrary>], iteration_bounds = array<i64: 2, 2>, scalar_prefetch = 0 : i64, scratch_operands = 1 : i64, tpu.core_type = #tpu.core_type<tc>, window_params = [{transform_indices = @transform_0, window_bounds = array<i64: 8, 64>}, {transform_indices = @transform_1, window_bounds = array<i64: 1, 16, 256>}, {transform_indices = @transform_2, window_bounds = array<i64: 1, 64, 64>}, {transform_indices = @transform_3, window_bounds = array<i64: 1, 64, 64>}, {transform_indices = @transform_4, window_bounds = array<i64: 1, 64, 64>}, {transform_indices = @transform_5, window_bounds = array<i64: 1, 64, 64>}, {transform_indices = @transform_6, window_bounds = array<i64: 1, 64, 256>}, {transform_indices = @transform_7, window_bounds = array<i64: 1, 256, 64>}, {pipeline_mode = #tpu.pipeline_mode<synchronous>, transform_indices = @transform_8, window_bounds = array<i64: 1, 64>}, {pipeline_mode = #tpu.pipeline_mode<synchronous>, transform_indices = @transform_9, window_bounds = array<i64: 1, 64>}, {transform_indices = @transform_10, window_bounds = array<i64: 8, 64>}]} {
    %c0_i32 = arith.constant 0 : i32
    %0 = arith.cmpi eq, %arg1, %c0_i32 : i32
    %1 = arith.extui %0 : i1 to i32
    %c0_i32_0 = arith.constant 0 : i32
    %2 = arith.cmpi ne, %1, %c0_i32_0 : i32
    scf.if %2 {
      %c0_75 = arith.constant 0 : index
      %c0_76 = arith.constant 0 : index
      %227 = vector.load %arg2[%c0_75, %c0_76] : memref<8x64xf32, #tpu.memory_space<vmem>>, vector<8x64xf32>
      %c0_77 = arith.constant 0 : index
      %c0_78 = arith.constant 0 : index
      %228 = vector.load %arg13[%c0_77, %c0_78] : memref<8x64xf32, #tpu.memory_space<vmem>>, vector<8x64xf32>
      tpu.vector_store %arg13[%c0_77, %c0_78], %227 {strides = array<i32>} : memref<8x64xf32, #tpu.memory_space<vmem>>, vector<8x64xf32>,
    } else {
    }
    %c0 = arith.constant 0 : index
    %c0_1 = arith.constant 0 : index
    %3 = vector.load %arg13[%c0, %c0_1] : memref<8x64xf32, #tpu.memory_space<vmem>>, vector<8x64xf32>
    %c0_2 = arith.constant 0 : index
    %c0_3 = arith.constant 0 : index
    %c0_4 = arith.constant 0 : index
    %4 = vector.load %arg3[%c0_2, %c0_3, %c0_4] : memref<1x16x256xf32, #tpu.memory_space<vmem>>, vector<1x16x256xf32>
    %5 = vector.shape_cast %4 : vector<1x16x256xf32> to vector<16x256xf32>
    %6 = vector.extract_strided_slice %5 {offsets = [0, 0], sizes = [1, 64], strides = [1, 1]} : vector<16x256xf32> to vector<1x64xf32>
    %7 = vector.extract_strided_slice %5 {offsets = [1, 0], sizes = [1, 64], strides = [1, 1]} : vector<16x256xf32> to vector<1x64xf32>
    %cst = arith.constant dense<0.000000e+00> : vector<8xf32>
    %8 = vector.multi_reduction <add>, %3, %cst [1] : vector<8x64xf32> to vector<8xf32>
    %9 = vector.shape_cast %8 : vector<8xf32> to vector<8x1xf32>
    %cst_5 = arith.constant 6.400000e+01 : f32
    %10 = vector.broadcast %cst_5 : f32 to vector<8x1xf32>
    %11 = arith.divf %9, %10 : vector<8x1xf32>
    %12 = vector.broadcast %11 : vector<8x1xf32> to vector<8x64xf32>
    %13 = arith.subf %3, %12 : vector<8x64xf32>
    %14 = arith.mulf %13, %13 : vector<8x64xf32>
    %cst_6 = arith.constant dense<0.000000e+00> : vector<8xf32>
    %15 = vector.multi_reduction <add>, %14, %cst_6 [1] : vector<8x64xf32> to vector<8xf32>
    %16 = vector.shape_cast %15 : vector<8xf32> to vector<8x1xf32>
    %cst_7 = arith.constant 6.400000e+01 : f32
    %17 = vector.broadcast %cst_7 : f32 to vector<8x1xf32>
    %18 = arith.divf %16, %17 : vector<8x1xf32>
    %cst_8 = arith.constant 9.99999997E-7 : f32
    %19 = vector.broadcast %cst_8 : f32 to vector<8x1xf32>
    %20 = arith.addf %18, %19 : vector<8x1xf32>
    %21 = math.rsqrt %20 : vector<8x1xf32>
    %22 = vector.broadcast %21 : vector<8x1xf32> to vector<8x64xf32>
    %23 = arith.mulf %13, %22 : vector<8x64xf32>
    %24 = vector.broadcast %6 : vector<1x64xf32> to vector<8x64xf32>
    %25 = arith.mulf %23, %24 : vector<8x64xf32>
    %26 = vector.broadcast %7 : vector<1x64xf32> to vector<8x64xf32>
    %27 = arith.addf %25, %26 : vector<8x64xf32>
    %28 = arith.truncf %27 : vector<8x64xf32> to vector<8x64xbf16>
    %c0_9 = arith.constant 0 : index
    %c0_10 = arith.constant 0 : index
    %c0_11 = arith.constant 0 : index
    %29 = vector.load %arg4[%c0_9, %c0_10, %c0_11] : memref<1x64x64xbf16, #tpu.memory_space<vmem>>, vector<1x64x64xbf16>
    %30 = vector.shape_cast %29 : vector<1x64x64xbf16> to vector<64x64xbf16>
    %cst_12 = arith.constant dense<0.000000e+00> : vector<8x64xf32>
    %31 = tpu.matmul %28, %30, %cst_12 {dimension_numbers = #tpu.dot_dimension_numbers<[1], [0], [0], [1], [0, 0, 1, 1], [], []>} : vector<8x64xbf16>, vector<64x64xbf16>, vector<8x64xf32> -> vector<8x64xf32>
    %32 = vector.extract_strided_slice %5 {offsets = [2, 0], sizes = [1, 64], strides = [1, 1]} : vector<16x256xf32> to vector<1x64xf32>
    %33 = vector.broadcast %32 : vector<1x64xf32> to vector<8x64xf32>
    %34 = arith.addf %31, %33 : vector<8x64xf32>
    %cst_13 = arith.constant 2.500000e-01 : f32
    %35 = vector.broadcast %cst_13 : f32 to vector<8x64xf32>
    %36 = arith.mulf %34, %35 : vector<8x64xf32>
    %c0_14 = arith.constant 0 : index
    %c0_15 = arith.constant 0 : index
    %c0_16 = arith.constant 0 : index
    %37 = vector.load %arg5[%c0_14, %c0_15, %c0_16] : memref<1x64x64xbf16, #tpu.memory_space<vmem>>, vector<1x64x64xbf16>
    %38 = vector.shape_cast %37 : vector<1x64x64xbf16> to vector<64x64xbf16>
    %cst_17 = arith.constant dense<0.000000e+00> : vector<8x64xf32>
    %39 = tpu.matmul %28, %38, %cst_17 {dimension_numbers = #tpu.dot_dimension_numbers<[1], [0], [0], [1], [0, 0, 1, 1], [], []>} : vector<8x64xbf16>, vector<64x64xbf16>, vector<8x64xf32> -> vector<8x64xf32>
    %40 = vector.extract_strided_slice %5 {offsets = [3, 0], sizes = [1, 64], strides = [1, 1]} : vector<16x256xf32> to vector<1x64xf32>
    %41 = vector.broadcast %40 : vector<1x64xf32> to vector<8x64xf32>
    %42 = arith.addf %39, %41 : vector<8x64xf32>
    %c0_18 = arith.constant 0 : index
    %c0_19 = arith.constant 0 : index
    %c0_20 = arith.constant 0 : index
    %43 = vector.load %arg6[%c0_18, %c0_19, %c0_20] : memref<1x64x64xbf16, #tpu.memory_space<vmem>>, vector<1x64x64xbf16>
    %44 = vector.shape_cast %43 : vector<1x64x64xbf16> to vector<64x64xbf16>
    %cst_21 = arith.constant dense<0.000000e+00> : vector<8x64xf32>
    %45 = tpu.matmul %28, %44, %cst_21 {dimension_numbers = #tpu.dot_dimension_numbers<[1], [0], [0], [1], [0, 0, 1, 1], [], []>} : vector<8x64xbf16>, vector<64x64xbf16>, vector<8x64xf32> -> vector<8x64xf32>
    %46 = vector.extract_strided_slice %5 {offsets = [4, 0], sizes = [1, 64], strides = [1, 1]} : vector<16x256xf32> to vector<1x64xf32>
    %47 = vector.broadcast %46 : vector<1x64xf32> to vector<8x64xf32>
    %48 = arith.addf %45, %47 : vector<8x64xf32>
    %49 = tpu.iota {dimensions = array<i32: 1>} : vector<8x8xi32>
    %c5_i32 = arith.constant 5 : i32
    %50 = vector.broadcast %c5_i32 : i32 to vector<8x8xi32>
    %51 = arith.cmpi slt, %49, %50 : vector<8x8xi32>
    %cst_22 = arith.constant 0.000000e+00 : f32
    %cst_23 = arith.constant -1.000000e+30 : f32
    %52 = vector.broadcast %cst_22 : f32 to vector<8x8xf32>
    %53 = vector.broadcast %cst_23 : f32 to vector<8x8xf32>
    %54 = arith.select %51, %52, %53 : vector<8x8xi1>, vector<8x8xf32>
    %55 = vector.extract_strided_slice %36 {offsets = [0, 0], sizes = [8, 16], strides = [1, 1]} : vector<8x64xf32> to vector<8x16xf32>
    %56 = arith.truncf %55 : vector<8x16xf32> to vector<8x16xbf16>
    %57 = vector.extract_strided_slice %42 {offsets = [0, 0], sizes = [8, 16], strides = [1, 1]} : vector<8x64xf32> to vector<8x16xf32>
    %58 = arith.truncf %57 : vector<8x16xf32> to vector<8x16xbf16>
    %59 = vector.extract_strided_slice %48 {offsets = [0, 0], sizes = [8, 16], strides = [1, 1]} : vector<8x64xf32> to vector<8x16xf32>
    %60 = arith.truncf %59 : vector<8x16xf32> to vector<8x16xbf16>
    %cst_24 = arith.constant dense<0.000000e+00> : vector<8x8xf32>
    %61 = tpu.matmul %56, %58, %cst_24 {dimension_numbers = #tpu.dot_dimension_numbers<[1], [1], [0], [0], [0, 0, 1, 0], [], []>} : vector<8x16xbf16>, vector<8x16xbf16>, vector<8x8xf32> -> vector<8x8xf32>
    %62 = arith.addf %61, %54 : vector<8x8xf32>
    %cst_25 = arith.constant dense<0xFF800000> : vector<8xf32>
    %63 = vector.multi_reduction <maximumf>, %62, %cst_25 [1] : vector<8x8xf32> to vector<8xf32>
    %64 = vector.shape_cast %63 : vector<8xf32> to vector<8x1xf32>
    %65 = vector.broadcast %64 : vector<8x1xf32> to vector<8x8xf32>
    %66 = arith.subf %62, %65 : vector<8x8xf32>
    %67 = math.exp %66 : vector<8x8xf32>
    %cst_26 = arith.constant dense<0.000000e+00> : vector<8xf32>
    %68 = vector.multi_reduction <add>, %67, %cst_26 [1] : vector<8x8xf32> to vector<8xf32>
    %69 = vector.shape_cast %68 : vector<8xf32> to vector<8x1xf32>
    %70 = vector.broadcast %69 : vector<8x1xf32> to vector<8x8xf32>
    %71 = arith.divf %67, %70 : vector<8x8xf32>
    %72 = arith.truncf %71 : vector<8x8xf32> to vector<8x8xbf16>
    %cst_27 = arith.constant dense<0.000000e+00> : vector<8x16xf32>
    %73 = tpu.matmul %72, %60, %cst_27 {dimension_numbers = #tpu.dot_dimension_numbers<[1], [0], [0], [1], [0, 0, 1, 1], [], []>} : vector<8x8xbf16>, vector<8x16xbf16>, vector<8x16xf32> -> vector<8x16xf32>
    %74 = vector.extract_strided_slice %36 {offsets = [0, 16], sizes = [8, 16], strides = [1, 1]} : vector<8x64xf32> to vector<8x16xf32>
    %75 = arith.truncf %74 : vector<8x16xf32> to vector<8x16xbf16>
    %76 = vector.extract_strided_slice %42 {offsets = [0, 16], sizes = [8, 16], strides = [1, 1]} : vector<8x64xf32> to vector<8x16xf32>
    %77 = arith.truncf %76 : vector<8x16xf32> to vector<8x16xbf16>
    %78 = vector.extract_strided_slice %48 {offsets = [0, 16], sizes = [8, 16], strides = [1, 1]} : vector<8x64xf32> to vector<8x16xf32>
    %79 = arith.truncf %78 : vector<8x16xf32> to vector<8x16xbf16>
    %cst_28 = arith.constant dense<0.000000e+00> : vector<8x8xf32>
    %80 = tpu.matmul %75, %77, %cst_28 {dimension_numbers = #tpu.dot_dimension_numbers<[1], [1], [0], [0], [0, 0, 1, 0], [], []>} : vector<8x16xbf16>, vector<8x16xbf16>, vector<8x8xf32> -> vector<8x8xf32>
    %81 = arith.addf %80, %54 : vector<8x8xf32>
    %cst_29 = arith.constant dense<0xFF800000> : vector<8xf32>
    %82 = vector.multi_reduction <maximumf>, %81, %cst_29 [1] : vector<8x8xf32> to vector<8xf32>
    %83 = vector.shape_cast %82 : vector<8xf32> to vector<8x1xf32>
    %84 = vector.broadcast %83 : vector<8x1xf32> to vector<8x8xf32>
    %85 = arith.subf %81, %84 : vector<8x8xf32>
    %86 = math.exp %85 : vector<8x8xf32>
    %cst_30 = arith.constant dense<0.000000e+00> : vector<8xf32>
    %87 = vector.multi_reduction <add>, %86, %cst_30 [1] : vector<8x8xf32> to vector<8xf32>
    %88 = vector.shape_cast %87 : vector<8xf32> to vector<8x1xf32>
    %89 = vector.broadcast %88 : vector<8x1xf32> to vector<8x8xf32>
    %90 = arith.divf %86, %89 : vector<8x8xf32>
    %91 = arith.truncf %90 : vector<8x8xf32> to vector<8x8xbf16>
    %cst_31 = arith.constant dense<0.000000e+00> : vector<8x16xf32>
    %92 = tpu.matmul %91, %79, %cst_31 {dimension_numbers = #tpu.dot_dimension_numbers<[1], [0], [0], [1], [0, 0, 1, 1], [], []>} : vector<8x8xbf16>, vector<8x16xbf16>, vector<8x16xf32> -> vector<8x16xf32>
    %93 = vector.extract_strided_slice %36 {offsets = [0, 32], sizes = [8, 16], strides = [1, 1]} : vector<8x64xf32> to vector<8x16xf32>
    %94 = arith.truncf %93 : vector<8x16xf32> to vector<8x16xbf16>
    %95 = vector.extract_strided_slice %42 {offsets = [0, 32], sizes = [8, 16], strides = [1, 1]} : vector<8x64xf32> to vector<8x16xf32>
    %96 = arith.truncf %95 : vector<8x16xf32> to vector<8x16xbf16>
    %97 = vector.extract_strided_slice %48 {offsets = [0, 32], sizes = [8, 16], strides = [1, 1]} : vector<8x64xf32> to vector<8x16xf32>
    %98 = arith.truncf %97 : vector<8x16xf32> to vector<8x16xbf16>
    %cst_32 = arith.constant dense<0.000000e+00> : vector<8x8xf32>
    %99 = tpu.matmul %94, %96, %cst_32 {dimension_numbers = #tpu.dot_dimension_numbers<[1], [1], [0], [0], [0, 0, 1, 0], [], []>} : vector<8x16xbf16>, vector<8x16xbf16>, vector<8x8xf32> -> vector<8x8xf32>
    %100 = arith.addf %99, %54 : vector<8x8xf32>
    %cst_33 = arith.constant dense<0xFF800000> : vector<8xf32>
    %101 = vector.multi_reduction <maximumf>, %100, %cst_33 [1] : vector<8x8xf32> to vector<8xf32>
    %102 = vector.shape_cast %101 : vector<8xf32> to vector<8x1xf32>
    %103 = vector.broadcast %102 : vector<8x1xf32> to vector<8x8xf32>
    %104 = arith.subf %100, %103 : vector<8x8xf32>
    %105 = math.exp %104 : vector<8x8xf32>
    %cst_34 = arith.constant dense<0.000000e+00> : vector<8xf32>
    %106 = vector.multi_reduction <add>, %105, %cst_34 [1] : vector<8x8xf32> to vector<8xf32>
    %107 = vector.shape_cast %106 : vector<8xf32> to vector<8x1xf32>
    %108 = vector.broadcast %107 : vector<8x1xf32> to vector<8x8xf32>
    %109 = arith.divf %105, %108 : vector<8x8xf32>
    %110 = arith.truncf %109 : vector<8x8xf32> to vector<8x8xbf16>
    %cst_35 = arith.constant dense<0.000000e+00> : vector<8x16xf32>
    %111 = tpu.matmul %110, %98, %cst_35 {dimension_numbers = #tpu.dot_dimension_numbers<[1], [0], [0], [1], [0, 0, 1, 1], [], []>} : vector<8x8xbf16>, vector<8x16xbf16>, vector<8x16xf32> -> vector<8x16xf32>
    %112 = vector.extract_strided_slice %36 {offsets = [0, 48], sizes = [8, 16], strides = [1, 1]} : vector<8x64xf32> to vector<8x16xf32>
    %113 = arith.truncf %112 : vector<8x16xf32> to vector<8x16xbf16>
    %114 = vector.extract_strided_slice %42 {offsets = [0, 48], sizes = [8, 16], strides = [1, 1]} : vector<8x64xf32> to vector<8x16xf32>
    %115 = arith.truncf %114 : vector<8x16xf32> to vector<8x16xbf16>
    %116 = vector.extract_strided_slice %48 {offsets = [0, 48], sizes = [8, 16], strides = [1, 1]} : vector<8x64xf32> to vector<8x16xf32>
    %117 = arith.truncf %116 : vector<8x16xf32> to vector<8x16xbf16>
    %cst_36 = arith.constant dense<0.000000e+00> : vector<8x8xf32>
    %118 = tpu.matmul %113, %115, %cst_36 {dimension_numbers = #tpu.dot_dimension_numbers<[1], [1], [0], [0], [0, 0, 1, 0], [], []>} : vector<8x16xbf16>, vector<8x16xbf16>, vector<8x8xf32> -> vector<8x8xf32>
    %119 = arith.addf %118, %54 : vector<8x8xf32>
    %cst_37 = arith.constant dense<0xFF800000> : vector<8xf32>
    %120 = vector.multi_reduction <maximumf>, %119, %cst_37 [1] : vector<8x8xf32> to vector<8xf32>
    %121 = vector.shape_cast %120 : vector<8xf32> to vector<8x1xf32>
    %122 = vector.broadcast %121 : vector<8x1xf32> to vector<8x8xf32>
    %123 = arith.subf %119, %122 : vector<8x8xf32>
    %124 = math.exp %123 : vector<8x8xf32>
    %cst_38 = arith.constant dense<0.000000e+00> : vector<8xf32>
    %125 = vector.multi_reduction <add>, %124, %cst_38 [1] : vector<8x8xf32> to vector<8xf32>
    %126 = vector.shape_cast %125 : vector<8xf32> to vector<8x1xf32>
    %127 = vector.broadcast %126 : vector<8x1xf32> to vector<8x8xf32>
    %128 = arith.divf %124, %127 : vector<8x8xf32>
    %129 = arith.truncf %128 : vector<8x8xf32> to vector<8x8xbf16>
    %cst_39 = arith.constant dense<0.000000e+00> : vector<8x16xf32>
    %130 = tpu.matmul %129, %117, %cst_39 {dimension_numbers = #tpu.dot_dimension_numbers<[1], [0], [0], [1], [0, 0, 1, 1], [], []>} : vector<8x8xbf16>, vector<8x16xbf16>, vector<8x16xf32> -> vector<8x16xf32>
    %131 = tpu.concatenate %73, %92, %111, %130 in 1 : vector<8x16xf32>, vector<8x16xf32>, vector<8x16xf32>, vector<8x16xf32> -> vector<8x64xf32>
    %132 = arith.truncf %131 : vector<8x64xf32> to vector<8x64xbf16>
    %c0_40 = arith.constant 0 : index
    %c0_41 = arith.constant 0 : index
    %c0_42 = arith.constant 0 : index
    %133 = vector.load %arg7[%c0_40, %c0_41, %c0_42] : memref<1x64x64xbf16, #tpu.memory_space<vmem>>, vector<1x64x64xbf16>
    %134 = vector.shape_cast %133 : vector<1x64x64xbf16> to vector<64x64xbf16>
    %cst_43 = arith.constant dense<0.000000e+00> : vector<8x64xf32>
    %135 = tpu.matmul %132, %134, %cst_43 {dimension_numbers = #tpu.dot_dimension_numbers<[1], [0], [0], [1], [0, 0, 1, 1], [], []>} : vector<8x64xbf16>, vector<64x64xbf16>, vector<8x64xf32> -> vector<8x64xf32>
    %136 = vector.extract_strided_slice %5 {offsets = [5, 0], sizes = [1, 64], strides = [1, 1]} : vector<16x256xf32> to vector<1x64xf32>
    %137 = vector.broadcast %136 : vector<1x64xf32> to vector<8x64xf32>
    %138 = arith.addf %135, %137 : vector<8x64xf32>
    %139 = vector.extract_strided_slice %5 {offsets = [6, 0], sizes = [1, 64], strides = [1, 1]} : vector<16x256xf32> to vector<1x64xf32>
    %140 = vector.broadcast %139 : vector<1x64xf32> to vector<8x64xf32>
    %141 = arith.mulf %140, %138 : vector<8x64xf32>
    %142 = arith.addf %3, %141 : vector<8x64xf32>
    %143 = vector.extract_strided_slice %5 {offsets = [7, 0], sizes = [1, 64], strides = [1, 1]} : vector<16x256xf32> to vector<1x64xf32>
    %144 = vector.extract_strided_slice %5 {offsets = [8, 0], sizes = [1, 64], strides = [1, 1]} : vector<16x256xf32> to vector<1x64xf32>
    %cst_44 = arith.constant dense<0.000000e+00> : vector<8xf32>
    %145 = vector.multi_reduction <add>, %142, %cst_44 [1] : vector<8x64xf32> to vector<8xf32>
    %146 = vector.shape_cast %145 : vector<8xf32> to vector<8x1xf32>
    %cst_45 = arith.constant 6.400000e+01 : f32
    %147 = vector.broadcast %cst_45 : f32 to vector<8x1xf32>
    %148 = arith.divf %146, %147 : vector<8x1xf32>
    %149 = vector.broadcast %148 : vector<8x1xf32> to vector<8x64xf32>
    %150 = arith.subf %142, %149 : vector<8x64xf32>
    %151 = arith.mulf %150, %150 : vector<8x64xf32>
    %cst_46 = arith.constant dense<0.000000e+00> : vector<8xf32>
    %152 = vector.multi_reduction <add>, %151, %cst_46 [1] : vector<8x64xf32> to vector<8xf32>
    %153 = vector.shape_cast %152 : vector<8xf32> to vector<8x1xf32>
    %cst_47 = arith.constant 6.400000e+01 : f32
    %154 = vector.broadcast %cst_47 : f32 to vector<8x1xf32>
    %155 = arith.divf %153, %154 : vector<8x1xf32>
    %cst_48 = arith.constant 9.99999997E-7 : f32
    %156 = vector.broadcast %cst_48 : f32 to vector<8x1xf32>
    %157 = arith.addf %155, %156 : vector<8x1xf32>
    %158 = math.rsqrt %157 : vector<8x1xf32>
    %159 = vector.broadcast %158 : vector<8x1xf32> to vector<8x64xf32>
    %160 = arith.mulf %150, %159 : vector<8x64xf32>
    %161 = vector.broadcast %143 : vector<1x64xf32> to vector<8x64xf32>
    %162 = arith.mulf %160, %161 : vector<8x64xf32>
    %163 = vector.broadcast %144 : vector<1x64xf32> to vector<8x64xf32>
    %164 = arith.addf %162, %163 : vector<8x64xf32>
    %165 = arith.truncf %164 : vector<8x64xf32> to vector<8x64xbf16>
    %c0_49 = arith.constant 0 : index
    %c0_50 = arith.constant 0 : index
    %c0_51 = arith.constant 0 : index
    %166 = vector.load %arg8[%c0_49, %c0_50, %c0_51] : memref<1x64x256xbf16, #tpu.memory_space<vmem>>, vector<1x64x256xbf16>
    %167 = vector.shape_cast %166 : vector<1x64x256xbf16> to vector<64x256xbf16>
    %cst_52 = arith.constant dense<0.000000e+00> : vector<8x256xf32>
    %168 = tpu.matmul %165, %167, %cst_52 {dimension_numbers = #tpu.dot_dimension_numbers<[1], [0], [0], [1], [0, 0, 1, 1], [], []>} : vector<8x64xbf16>, vector<64x256xbf16>, vector<8x256xf32> -> vector<8x256xf32>
    %169 = vector.extract_strided_slice %5 {offsets = [9, 0], sizes = [1, 256], strides = [1, 1]} : vector<16x256xf32> to vector<1x256xf32>
    %170 = vector.broadcast %169 : vector<1x256xf32> to vector<8x256xf32>
    %171 = arith.addf %168, %170 : vector<8x256xf32>
    %cst_53 = arith.constant 5.000000e-01 : f32
    %172 = vector.broadcast %cst_53 : f32 to vector<8x256xf32>
    %173 = arith.mulf %172, %171 : vector<8x256xf32>
    %cst_54 = arith.constant 0.707106769 : f32
    %174 = vector.broadcast %cst_54 : f32 to vector<8x256xf32>
    %175 = arith.mulf %171, %174 : vector<8x256xf32>
    %176 = math.absf %175 : vector<8x256xf32>
    %cst_55 = arith.constant 0.327591091 : f32
    %177 = vector.broadcast %cst_55 : f32 to vector<8x256xf32>
    %178 = arith.mulf %177, %176 : vector<8x256xf32>
    %cst_56 = arith.constant 1.000000e+00 : f32
    %179 = vector.broadcast %cst_56 : f32 to vector<8x256xf32>
    %180 = arith.addf %179, %178 : vector<8x256xf32>
    %cst_57 = arith.constant 1.000000e+00 : f32
    %181 = vector.broadcast %cst_57 : f32 to vector<8x256xf32>
    %182 = arith.divf %181, %180 : vector<8x256xf32>
    %cst_58 = arith.constant 1.06140542 : f32
    %183 = vector.broadcast %cst_58 : f32 to vector<8x256xf32>
    %184 = arith.mulf %183, %182 : vector<8x256xf32>
    %cst_59 = arith.constant -1.45315206 : f32
    %185 = vector.broadcast %cst_59 : f32 to vector<8x256xf32>
    %186 = arith.addf %184, %185 : vector<8x256xf32>
    %187 = arith.mulf %186, %182 : vector<8x256xf32>
    %cst_60 = arith.constant 1.42141378 : f32
    %188 = vector.broadcast %cst_60 : f32 to vector<8x256xf32>
    %189 = arith.addf %187, %188 : vector<8x256xf32>
    %190 = arith.mulf %189, %182 : vector<8x256xf32>
    %cst_61 = arith.constant -0.284496725 : f32
    %191 = vector.broadcast %cst_61 : f32 to vector<8x256xf32>
    %192 = arith.addf %190, %191 : vector<8x256xf32>
    %193 = arith.mulf %192, %182 : vector<8x256xf32>
    %cst_62 = arith.constant 0.254829586 : f32
    %194 = vector.broadcast %cst_62 : f32 to vector<8x256xf32>
    %195 = arith.addf %193, %194 : vector<8x256xf32>
    %196 = arith.mulf %195, %182 : vector<8x256xf32>
    %cst_63 = arith.constant 0.000000e+00 : f32
    %197 = vector.broadcast %cst_63 : f32 to vector<8x256xf32>
    %198 = arith.subf %197, %176 : vector<8x256xf32>
    %199 = arith.mulf %198, %176 : vector<8x256xf32>
    %200 = math.exp %199 : vector<8x256xf32>
    %201 = arith.mulf %196, %200 : vector<8x256xf32>
    %cst_64 = arith.constant 1.000000e+00 : f32
    %202 = vector.broadcast %cst_64 : f32 to vector<8x256xf32>
    %203 = arith.subf %202, %201 : vector<8x256xf32>
    %cst_65 = arith.constant 0.000000e+00 : f32
    %204 = vector.broadcast %cst_65 : f32 to vector<8x256xf32>
    %205 = arith.cmpf oge, %175, %204 : vector<8x256xf32>
    %cst_66 = arith.constant 0.000000e+00 : f32
    %206 = vector.broadcast %cst_66 : f32 to vector<8x256xf32>
    %207 = arith.subf %206, %203 : vector<8x256xf32>
    %208 = arith.select %205, %203, %207 : vector<8x256xi1>, vector<8x256xf32>
    %cst_67 = arith.constant 1.000000e+00 : f32
    %209 = vector.broadcast %cst_67 : f32 to vector<8x256xf32>
    %210 = arith.addf %209, %208 : vector<8x256xf32>
    %211 = arith.mulf %173, %210 : vector<8x256xf32>
    %212 = arith.truncf %211 : vector<8x256xf32> to vector<8x256xbf16>
    %c0_68 = arith.constant 0 : index
    %c0_69 = arith.constant 0 : index
    %c0_70 = arith.constant 0 : index
    %213 = vector.load %arg9[%c0_68, %c0_69, %c0_70] : memref<1x256x64xbf16, #tpu.memory_space<vmem>>, vector<1x256x64xbf16>
    %214 = vector.shape_cast %213 : vector<1x256x64xbf16> to vector<256x64xbf16>
    %cst_71 = arith.constant dense<0.000000e+00> : vector<8x64xf32>
    %215 = tpu.matmul %212, %214, %cst_71 {dimension_numbers = #tpu.dot_dimension_numbers<[1], [0], [0], [1], [0, 0, 1, 1], [], []>} : vector<8x256xbf16>, vector<256x64xbf16>, vector<8x64xf32> -> vector<8x64xf32>
    %216 = vector.extract_strided_slice %5 {offsets = [10, 0], sizes = [1, 64], strides = [1, 1]} : vector<16x256xf32> to vector<1x64xf32>
    %217 = vector.broadcast %216 : vector<1x64xf32> to vector<8x64xf32>
    %218 = arith.addf %215, %217 : vector<8x64xf32>
    %219 = vector.extract_strided_slice %5 {offsets = [11, 0], sizes = [1, 64], strides = [1, 1]} : vector<16x256xf32> to vector<1x64xf32>
    %220 = vector.broadcast %219 : vector<1x64xf32> to vector<8x64xf32>
    %221 = arith.mulf %220, %218 : vector<8x64xf32>
    %222 = arith.addf %142, %221 : vector<8x64xf32>
    %c0_72 = arith.constant 0 : index
    %c0_73 = arith.constant 0 : index
    %223 = vector.load %arg13[%c0_72, %c0_73] : memref<8x64xf32, #tpu.memory_space<vmem>>, vector<8x64xf32>
    tpu.vector_store %arg13[%c0_72, %c0_73], %222 {strides = array<i32>} : memref<8x64xf32, #tpu.memory_space<vmem>>, vector<8x64xf32>,
    %c1_i32 = arith.constant 1 : i32
    %224 = arith.cmpi eq, %arg1, %c1_i32 : i32
    %225 = arith.extui %224 : i1 to i32
    %c0_i32_74 = arith.constant 0 : i32
    %226 = arith.cmpi ne, %225, %c0_i32_74 : i32
    scf.if %226 {
      %c0_75 = arith.constant 0 : index
      %c0_76 = arith.constant 0 : index
      %227 = vector.load %arg10[%c0_75, %c0_76] : memref<1x64xf32, #tpu.memory_space<vmem>>, vector<1x64xf32>
      %c0_77 = arith.constant 0 : index
      %c0_78 = arith.constant 0 : index
      %228 = vector.load %arg11[%c0_77, %c0_78] : memref<1x64xf32, #tpu.memory_space<vmem>>, vector<1x64xf32>
      %cst_79 = arith.constant dense<0.000000e+00> : vector<8xf32>
      %229 = vector.multi_reduction <add>, %222, %cst_79 [1] : vector<8x64xf32> to vector<8xf32>
      %230 = vector.shape_cast %229 : vector<8xf32> to vector<8x1xf32>
      %cst_80 = arith.constant 6.400000e+01 : f32
      %231 = vector.broadcast %cst_80 : f32 to vector<8x1xf32>
      %232 = arith.divf %230, %231 : vector<8x1xf32>
      %233 = vector.broadcast %232 : vector<8x1xf32> to vector<8x64xf32>
      %234 = arith.subf %222, %233 : vector<8x64xf32>
      %235 = arith.mulf %234, %234 : vector<8x64xf32>
      %cst_81 = arith.constant dense<0.000000e+00> : vector<8xf32>
      %236 = vector.multi_reduction <add>, %235, %cst_81 [1] : vector<8x64xf32> to vector<8xf32>
      %237 = vector.shape_cast %236 : vector<8xf32> to vector<8x1xf32>
      %cst_82 = arith.constant 6.400000e+01 : f32
      %238 = vector.broadcast %cst_82 : f32 to vector<8x1xf32>
      %239 = arith.divf %237, %238 : vector<8x1xf32>
      %cst_83 = arith.constant 9.99999997E-7 : f32
      %240 = vector.broadcast %cst_83 : f32 to vector<8x1xf32>
      %241 = arith.addf %239, %240 : vector<8x1xf32>
      %242 = math.rsqrt %241 : vector<8x1xf32>
      %243 = vector.broadcast %242 : vector<8x1xf32> to vector<8x64xf32>
      %244 = arith.mulf %234, %243 : vector<8x64xf32>
      %245 = vector.broadcast %227 : vector<1x64xf32> to vector<8x64xf32>
      %246 = arith.mulf %244, %245 : vector<8x64xf32>
      %247 = vector.broadcast %228 : vector<1x64xf32> to vector<8x64xf32>
      %248 = arith.addf %246, %247 : vector<8x64xf32>
      %c0_84 = arith.constant 0 : index
      %c0_85 = arith.constant 0 : index
      %249 = vector.load %arg12[%c0_84, %c0_85] : memref<8x64xf32, #tpu.memory_space<vmem>>, vector<8x64xf32>
      tpu.vector_store %arg12[%c0_84, %c0_85], %248 {strides = array<i32>} : memref<8x64xf32, #tpu.memory_space<vmem>>, vector<8x64xf32>,
    } else {
    }
    return
  }
  func.func @transform_0(%arg0: i32, %arg1: i32) -> (i32, i32) {
    %c0_i32 = arith.constant 0 : i32
    %c0_i32_0 = arith.constant 0 : i32
    return %arg0, %c0_i32 : i32, i32
  }
  func.func @transform_1(%arg0: i32, %arg1: i32) -> (i32, i32, i32) {
    %c0_i32 = arith.constant 0 : i32
    %c0_i32_0 = arith.constant 0 : i32
    %c0_i32_1 = arith.constant 0 : i32
    return %arg1, %c0_i32, %c0_i32_0 : i32, i32, i32
  }
  func.func @transform_2(%arg0: i32, %arg1: i32) -> (i32, i32, i32) {
    %c0_i32 = arith.constant 0 : i32
    %c0_i32_0 = arith.constant 0 : i32
    %c0_i32_1 = arith.constant 0 : i32
    return %arg1, %c0_i32, %c0_i32_0 : i32, i32, i32
  }
  func.func @transform_3(%arg0: i32, %arg1: i32) -> (i32, i32, i32) {
    %c0_i32 = arith.constant 0 : i32
    %c0_i32_0 = arith.constant 0 : i32
    %c0_i32_1 = arith.constant 0 : i32
    return %arg1, %c0_i32, %c0_i32_0 : i32, i32, i32
  }
  func.func @transform_4(%arg0: i32, %arg1: i32) -> (i32, i32, i32) {
    %c0_i32 = arith.constant 0 : i32
    %c0_i32_0 = arith.constant 0 : i32
    %c0_i32_1 = arith.constant 0 : i32
    return %arg1, %c0_i32, %c0_i32_0 : i32, i32, i32
  }
  func.func @transform_5(%arg0: i32, %arg1: i32) -> (i32, i32, i32) {
    %c0_i32 = arith.constant 0 : i32
    %c0_i32_0 = arith.constant 0 : i32
    %c0_i32_1 = arith.constant 0 : i32
    return %arg1, %c0_i32, %c0_i32_0 : i32, i32, i32
  }
  func.func @transform_6(%arg0: i32, %arg1: i32) -> (i32, i32, i32) {
    %c0_i32 = arith.constant 0 : i32
    %c0_i32_0 = arith.constant 0 : i32
    %c0_i32_1 = arith.constant 0 : i32
    return %arg1, %c0_i32, %c0_i32_0 : i32, i32, i32
  }
  func.func @transform_7(%arg0: i32, %arg1: i32) -> (i32, i32, i32) {
    %c0_i32 = arith.constant 0 : i32
    %c0_i32_0 = arith.constant 0 : i32
    %c0_i32_1 = arith.constant 0 : i32
    return %arg1, %c0_i32, %c0_i32_0 : i32, i32, i32
  }
  func.func @transform_8(%arg0: i32, %arg1: i32) -> (i32, i32) {
    %c0_i32 = arith.constant 0 : i32
    %c0_i32_0 = arith.constant 0 : i32
    %c0_i32_1 = arith.constant 0 : i32
    return %c0_i32, %c0_i32_0 : i32, i32
  }
  func.func @transform_9(%arg0: i32, %arg1: i32) -> (i32, i32) {
    %c0_i32 = arith.constant 0 : i32
    %c0_i32_0 = arith.constant 0 : i32
    %c0_i32_1 = arith.constant 0 : i32
    return %c0_i32, %c0_i32_0 : i32, i32
  }
  func.func @transform_10(%arg0: i32, %arg1: i32) -> (i32, i32) {
    %c0_i32 = arith.constant 0 : i32
    %c0_i32_0 = arith.constant 0 : i32
    return %arg0, %c0_i32 : i32, i32
  }
}

</mosaic_0001>

<llo_original>
// kernel: vit_forward.2
$region0: #{vit_forward.2}
  #allocation0 [shape = 'u32[]', space=smem, size = 0x4, offset = 0x4, fixed_abs, tag = 'smem constant byte address 0x4 - core index']
  #allocation1 [shape = 'u32[72,128]{1,0:T(1,128)}', space=vmem, size = 0x9000, scoped, tag = 'internal scratch']
  %s0 = inlined_call_operand.vmem [shape: f32[16,640], index: 0, kind: input, shape index: {}]
  %s1 = inlined_call_operand.vmem [shape: bf16[640,64], index: 1, kind: input, shape index: {}]
  %s2 = inlined_call_operand.vmem [shape: f32[8,64], index: 2, kind: input, shape index: {}]
  %s3 = inlined_call_operand.vmem [shape: f32[16,64], index: 3, kind: output, shape index: {}]
  %s4 = sld [smem:[#allocation0]]
  $region45: #{vit_forward.2} parent=0
    _
  %s6 = ssub.s32 1, %s4
  %s7 = scalar_select 0, %s6, %s4
  loop: start=0, step=1, limit=4
  $region2: #{vit_forward.2} parent=0 // loop_pre_header
    _
  $region3: #{vit_forward.2} parent=0 // loop_header
    %s9 = sphi 0, %s13
    %p10 = scmp.ge.s32.totalorder %s9, 4
    %s19 = sphi 0, %s21
    %s22 = sphi 0, %s19
    %s23 = sphi 0, %s22
    %s39 = sphi 0, %s23
    %s43 = sphi 0, %s43
    %s45 = sphi 0, %s43
    %s46 = sphi 0, %s45
    %s60 = sphi 0, %s46
    %s64 = sphi 0, %s64
    %s66 = sphi 0, %s64
    %s67 = sphi 0, %s66
    %s81 = sphi 0, %s67
    %s87 = sphi 0, %s89
    %s90 = sphi 0, %s87
    %s91 = sphi 0, %s90
    %s107 = sphi 0, %s91
  $region4: #{vit_forward.2} parent=0 // loop_header_branch
    %12 = sbr.rel (%p10) target = $region8
  $region5: #{vit_forward.2} parent=0 // loop_body
    %s14 = ssub.s32 %s9, 1
    %s15 = ssub.s32 %s9, 2
    %s16 = sadd.s32 %s9, 1
    %s17 = ssub.s32 %s9, %s16
    %p18 = scmp.eq.s32.totalorder %s17, 0
    %s20 = sadd.s32 %s19, 1
    %s21 = scalar_select %p18, %s19, %s20
    %p24 = pneg %p18
    %p25 = scmp.eq.s32.totalorder %s9, 1
    %p26 = por %p24, %p25
    %p27 = scmp.ne.s32.totalorder %s19, %s22
    %p28 = scmp.eq.s32.totalorder %s9, 0
    %p29 = por %p27, %p28
    %p30 = scmp.ne.s32.totalorder %s19, %s22
    %p31 = scmp.eq.s32.totalorder %s14, 1
    %p32 = por %p30, %p31
    %p33 = scmp.ne.s32.totalorder %s22, %s23
    %p34 = scmp.eq.s32.totalorder %s14, 0
    %p35 = por %p33, %p34
    %p36 = scmp.ne.s32.totalorder %s22, %s23
    %p37 = scmp.eq.s32.totalorder %s15, 1
    %p38 = por %p36, %p37
    %p40 = scmp.ne.s32.totalorder %s23, %s39
    %p41 = scmp.eq.s32.totalorder %s15, 0
    %p42 = por %p40, %p41
    %s44 = sadd.s32 %s43, 1
    %p47 = scmp.eq.s32.totalorder %s9, 1
    %p48 = scmp.ne.s32.totalorder %s43, %s45
    %p49 = scmp.eq.s32.totalorder %s9, 0
    %p50 = por %p48, %p49
    %p51 = scmp.ne.s32.totalorder %s43, %s45
    %p52 = scmp.eq.s32.totalorder %s14, 1
    %p53 = por %p51, %p52
    %p54 = scmp.ne.s32.totalorder %s45, %s46
    %p55 = scmp.eq.s32.totalorder %s14, 0
    %p56 = por %p54, %p55
    %p57 = scmp.ne.s32.totalorder %s45, %s46
    %p58 = scmp.eq.s32.totalorder %s15, 1
    %p59 = por %p57, %p58
    %p61 = scmp.ne.s32.totalorder %s46, %s60
    %p62 = scmp.eq.s32.totalorder %s15, 0
    %p63 = por %p61, %p62
    %s65 = sadd.s32 %s64, 1
    %p68 = scmp.eq.s32.totalorder %s9, 1
    %p69 = scmp.ne.s32.totalorder %s64, %s66
    %p70 = scmp.eq.s32.totalorder %s9, 0
    %p71 = por %p69, %p70
    %p72 = scmp.ne.s32.totalorder %s64, %s66
    %p73 = scmp.eq.s32.totalorder %s14, 1
    %p74 = por %p72, %p73
    %p75 = scmp.ne.s32.totalorder %s66, %s67
    %p76 = scmp.eq.s32.totalorder %s14, 0
    %p77 = por %p75, %p76
    %p78 = scmp.ne.s32.totalorder %s66, %s67
    %p79 = scmp.eq.s32.totalorder %s15, 1
    %p80 = por %p78, %p79
    %p82 = scmp.ne.s32.totalorder %s67, %s81
    %p83 = scmp.eq.s32.totalorder %s15, 0
    %p84 = por %p82, %p83
    %s85 = ssub.s32 %s9, %s16
    %p86 = scmp.eq.s32.totalorder %s85, 0
    %s88 = sadd.s32 %s87, 1
    %s89 = scalar_select %p86, %s87, %s88
    %p92 = pneg %p86
    %p93 = scmp.eq.s32.totalorder %s9, 1
    %p94 = por %p92, %p93
    %p95 = scmp.ne.s32.totalorder %s87, %s90
    %p96 = scmp.eq.s32.totalorder %s9, 0
    %p97 = por %p95, %p96
    %p98 = scmp.ne.s32.totalorder %s87, %s90
    %p99 = scmp.eq.s32.totalorder %s14, 1
    %p100 = por %p98, %p99
    %p101 = scmp.ne.s32.totalorder %s90, %s91
    %p102 = scmp.eq.s32.totalorder %s14, 0
    %p103 = por %p101, %p102
    %p104 = scmp.ne.s32.totalorder %s90, %s91
    %p105 = scmp.eq.s32.totalorder %s15, 1
    %p106 = por %p104, %p105
    %p108 = scmp.ne.s32.totalorder %s91, %s107
    %p109 = scmp.eq.s32.totalorder %s15, 0
    %p110 = por %p108, %p109
    %p111 = scmp.le.s32.totalorder 1, %s9
    %p112 = scmp.lt.s32.totalorder %s9, 3
    %p113 = pnand %p111, %p112
    %p114 = pneg %p113
    // Predicated region
    $region9: #{vit_forward.2} parent=5 // pred_check
      _
    $region10: #{vit_forward.2} parent=5 // pred_check_branch
      %116 = sbr.rel (%p113) target = $region12
    $region11: #{vit_forward.2} parent=5 // pred_region
      %s117 = ssub.s32 %s9, 1
      // Predicated region
      $region13: #{vit_forward.2} parent=11 // pred_check
        %p118 = pneg %p56
      $region14: #{vit_forward.2} parent=11 // pred_check_branch
        %120 = sbr.rel (%p118) target = $region16
      $region15: #{vit_forward.2} parent=11 // pred_region
        _
      $region16: #{vit_forward.2} parent=11 // pred_fallthru
        _
      // Predicated region
      $region17: #{vit_forward.2} parent=11 // pred_check
        %p121 = pneg %p77
      $region18: #{vit_forward.2} parent=11 // pred_check_branch
        %123 = sbr.rel (%p121) target = $region20
      $region19: #{vit_forward.2} parent=11 // pred_region
        _
      $region20: #{vit_forward.2} parent=11 // pred_fallthru
        _
    $region12: #{vit_forward.2} parent=5 // pred_fallthru
      _
    %p124 = scmp.lt.s32.totalorder %s9, 2
    // Predicated region
    $region21: #{vit_forward.2} parent=5 // pred_check
      %p125 = pneg %p124
    $region22: #{vit_forward.2} parent=5 // pred_check_branch
      %127 = sbr.rel (%p125) target = $region24
    $region23: #{vit_forward.2} parent=5 // pred_region
      // Predicated region
      $region25: #{vit_forward.2} parent=23 // pred_check
        %p128 = pneg %p29
      $region26: #{vit_forward.2} parent=23 // pred_check_branch
        %130 = sbr.rel (%p128) target = $region28
      $region27: #{vit_forward.2} parent=23 // pred_region
        %p131 = scmp.lt.s32.totalorder %s9, 1
        %s132 = scalar_select %p131, %s9, 1
        %s133 = smul.addr %s132, 5
        %s134 = smul.addr %s133, 8
        %s135 = scalar_lea.vmem %s0, %s134
      $region28: #{vit_forward.2} parent=23 // pred_fallthru
        _
    $region24: #{vit_forward.2} parent=5 // pred_fallthru
      _
    %p136 = scmp.le.s32.totalorder 1, %s9
    %p137 = scmp.lt.s32.totalorder %s9, 3
    %p138 = pnand %p136, %p137
    %p139 = pneg %p138
    // Predicated region
    $region29: #{vit_forward.2} parent=5 // pred_check
      _
    $region30: #{vit_forward.2} parent=5 // pred_check_branch
      %141 = sbr.rel (%p138) target = $region32
    $region31: #{vit_forward.2} parent=5 // pred_region
      %s142 = ssub.s32 %s9, 1
      %p143 = scmp.lt.s32.totalorder %s14, 1
      %s144 = scalar_select %p143, %s14, 1
      %s145 = smul.addr %s144, 5
      %s146 = smul.addr %s145, 8
      %s147 = scalar_lea.vmem %s0, %s146
      %p148 = pneg %p35
      %p149 = pneg %p32
      %p150 = pneg %p56
      %p151 = pneg %p53
      %p152 = pneg %p77
      %p153 = pneg %p74
      %p154 = pneg %p103
      %p155 = pneg %p100
      %p156 = scmp.lt.s32.totalorder %s14, 1
      %s157 = scalar_select %p156, %s14, 1
      %s158 = smul.addr %s157, 8
      %s159 = scalar_lea.vmem %s3, %s158
      %p160 = scmp.lt.s32.totalorder %s14, 1
      %s161 = scalar_select %p160, %s14, 1
      %s162 = smul.addr %s161, 5
      %s163 = smul.addr %s162, 8
      %s164 = scalar_lea.vmem %s0, %s163
      %p165 = scmp.lt.s32.totalorder %s14, 1
      %s166 = scalar_select %p165, %s14, 1
      %s167 = smul.addr %s166, 8
      %s168 = scalar_lea.vmem %s3, %s167
      %v169 = vld [vmem:[%s164] sm:$0xff]
      %v170 = vld [vmem:[%s164 + $0x8] sm:$0xff]
      %v171 = vld [vmem:[%s164 + $0x10] sm:$0xff]
      %v172 = vld [vmem:[%s164 + $0x18] sm:$0xff]
      %v173 = vld [vmem:[%s164 + $0x20] sm:$0xff]
      %v174 = vpack.c.bf16 %v169, %v169
      %v175 = vpack.c.bf16 %v170, %v170
      %v176 = vpack.c.bf16 %v171, %v171
      %v177 = vpack.c.bf16 %v172, %v172
      %v178 = vpack.c.bf16 %v173, %v173
      %v179 = vld [vmem:[%s1] sm:$0xf]
      %v180 = vld [vmem:[%s1 + $0x4] sm:$0xf]
      %v181 = vld [vmem:[%s1 + $0x8] sm:$0xf]
      %v182 = vld [vmem:[%s1 + $0xc] sm:$0xf]
      %v183 = vld [vmem:[%s1 + $0x10] sm:$0xf]
      %v184 = vld [vmem:[%s1 + $0x14] sm:$0xf]
      %v185 = vld [vmem:[%s1 + $0x18] sm:$0xf]
      %v186 = vld [vmem:[%s1 + $0x1c] sm:$0xf]
      %v187 = vld [vmem:[%s1 + $0x20] sm:$0xf]
      %v188 = vld [vmem:[%s1 + $0x24] sm:$0xf]
      %v189 = vld [vmem:[%s1 + $0x28] sm:$0xf]
      %v190 = vld [vmem:[%s1 + $0x2c] sm:$0xf]
      %v191 = vld [vmem:[%s1 + $0x30] sm:$0xf]
      %v192 = vld [vmem:[%s1 + $0x34] sm:$0xf]
      %v193 = vld [vmem:[%s1 + $0x38] sm:$0xf]
      %v194 = vld [vmem:[%s1 + $0x3c] sm:$0xf]
      %v195 = vld [vmem:[%s1 + $0x40] sm:$0xf]
      %v196 = vld [vmem:[%s1 + $0x44] sm:$0xf]
      %v197 = vld [vmem:[%s1 + $0x48] sm:$0xf]
      %v198 = vld [vmem:[%s1 + $0x4c] sm:$0xf]
      %v199 = vld [vmem:[%s1 + $0x50] sm:$0xf]
      %v200 = vld [vmem:[%s1 + $0x54] sm:$0xf]
      %v201 = vld [vmem:[%s1 + $0x58] sm:$0xf]
      %v202 = vld [vmem:[%s1 + $0x5c] sm:$0xf]
      %v203 = vld [vmem:[%s1 + $0x60] sm:$0xf]
      %v204 = vld [vmem:[%s1 + $0x64] sm:$0xf]
      %v205 = vld [vmem:[%s1 + $0x68] sm:$0xf]
      %v206 = vld [vmem:[%s1 + $0x6c] sm:$0xf]
      %v207 = vld [vmem:[%s1 + $0x70] sm:$0xf]
      %v208 = vld [vmem:[%s1 + $0x74] sm:$0xf]
      %v209 = vld [vmem:[%s1 + $0x78] sm:$0xf]
      %v210 = vld [vmem:[%s1 + $0x7c] sm:$0xf]
      %v211 = vld [vmem:[%s1 + $0x80] sm:$0xf]
      %v212 = vld [vmem:[%s1 + $0x84] sm:$0xf]
      %v213 = vld [vmem:[%s1 + $0x88] sm:$0xf]
      %v214 = vld [vmem:[%s1 + $0x8c] sm:$0xf]
      %v215 = vld [vmem:[%s1 + $0x90] sm:$0xf]
      %v216 = vld [vmem:[%s1 + $0x94] sm:$0xf]
      %v217 = vld [vmem:[%s1 + $0x98] sm:$0xf]
      %v218 = vld [vmem:[%s1 + $0x9c] sm:$0xf]
      %v219 = vld [vmem:[%s1 + $0xa0] sm:$0xf]
      %v220 = vld [vmem:[%s1 + $0xa4] sm:$0xf]
      %v221 = vld [vmem:[%s1 + $0xa8] sm:$0xf]
      %v222 = vld [vmem:[%s1 + $0xac] sm:$0xf]
      %v223 = vld [vmem:[%s1 + $0xb0] sm:$0xf]
      %v224 = vld [vmem:[%s1 + $0xb4] sm:$0xf]
      %v225 = vld [vmem:[%s1 + $0xb8] sm:$0xf]
      %v226 = vld [vmem:[%s1 + $0xbc] sm:$0xf]
      %v227 = vld [vmem:[%s1 + $0xc0] sm:$0xf]
      %v228 = vld [vmem:[%s1 + $0xc4] sm:$0xf]
      %v229 = vld [vmem:[%s1 + $0xc8] sm:$0xf]
      %v230 = vld [vmem:[%s1 + $0xcc] sm:$0xf]
      %v231 = vld [vmem:[%s1 + $0xd0] sm:$0xf]
      %v232 = vld [vmem:[%s1 + $0xd4] sm:$0xf]
      %v233 = vld [vmem:[%s1 + $0xd8] sm:$0xf]
      %v234 = vld [vmem:[%s1 + $0xdc] sm:$0xf]
      %v235 = vld [vmem:[%s1 + $0xe0] sm:$0xf]
      %v236 = vld [vmem:[%s1 + $0xe4] sm:$0xf]
      %v237 = vld [vmem:[%s1 + $0xe8] sm:$0xf]
      %v238 = vld [vmem:[%s1 + $0xec] sm:$0xf]
      %v239 = vld [vmem:[%s1 + $0xf0] sm:$0xf]
      %v240 = vld [vmem:[%s1 + $0xf4] sm:$0xf]
      %v241 = vld [vmem:[%s1 + $0xf8] sm:$0xf]
      %v242 = vld [vmem:[%s1 + $0xfc] sm:$0xf]
      %v243 = vld [vmem:[%s1 + $0x100] sm:$0xf]
      %v244 = vld [vmem:[%s1 + $0x104] sm:$0xf]
      %v245 = vld [vmem:[%s1 + $0x108] sm:$0xf]
      %v246 = vld [vmem:[%s1 + $0x10c] sm:$0xf]
      %v247 = vld [vmem:[%s1 + $0x110] sm:$0xf]
      %v248 = vld [vmem:[%s1 + $0x114] sm:$0xf]
      %v249 = vld [vmem:[%s1 + $0x118] sm:$0xf]
      %v250 = vld [vmem:[%s1 + $0x11c] sm:$0xf]
      %v251 = vld [vmem:[%s1 + $0x120] sm:$0xf]
      %v252 = vld [vmem:[%s1 + $0x124] sm:$0xf]
      %v253 = vld [vmem:[%s1 + $0x128] sm:$0xf]
      %v254 = vld [vmem:[%s1 + $0x12c] sm:$0xf]
      %v255 = vld [vmem:[%s1 + $0x130] sm:$0xf]
      %v256 = vld [vmem:[%s1 + $0x134] sm:$0xf]
      %v257 = vld [vmem:[%s1 + $0x138] sm:$0xf]
      %v258 = vld [vmem:[%s1 + $0x13c] sm:$0xf]
      %v259 = vld [vmem:[%s2] sm:$0xff]
      %v340 = vunpack.c.l.b16 %v179
      %v341 = vunpack.c.l.b16 %v180
      %v342 = vunpack.c.l.b16 %v181
      %v343 = vunpack.c.l.b16 %v182
      %v344 = vunpack.c.l.b16 %v183
      %v345 = vunpack.c.l.b16 %v184
      %v346 = vunpack.c.l.b16 %v185
      %v347 = vunpack.c.l.b16 %v186
      %v348 = vunpack.c.l.b16 %v187
      %v349 = vunpack.c.l.b16 %v188
      %v350 = vunpack.c.l.b16 %v189
      %v351 = vunpack.c.l.b16 %v190
      %v352 = vunpack.c.l.b16 %v191
      %v353 = vunpack.c.l.b16 %v192
      %v354 = vunpack.c.l.b16 %v193
      %v355 = vunpack.c.l.b16 %v194
      %v356 = vunpack.c.l.b16 %v195
      %v357 = vunpack.c.l.b16 %v196
      %v358 = vunpack.c.l.b16 %v197
      %v359 = vunpack.c.l.b16 %v198
      %v360 = vunpack.c.l.b16 %v199
      %v361 = vunpack.c.l.b16 %v200
      %v362 = vunpack.c.l.b16 %v201
      %v363 = vunpack.c.l.b16 %v202
      %v364 = vunpack.c.l.b16 %v203
      %v365 = vunpack.c.l.b16 %v204
      %v366 = vunpack.c.l.b16 %v205
      %v367 = vunpack.c.l.b16 %v206
      %v368 = vunpack.c.l.b16 %v207
      %v369 = vunpack.c.l.b16 %v208
      %v370 = vunpack.c.l.b16 %v209
      %v371 = vunpack.c.l.b16 %v210
      %v372 = vunpack.c.l.b16 %v211
      %v373 = vunpack.c.l.b16 %v212
      %v374 = vunpack.c.l.b16 %v213
      %v375 = vunpack.c.l.b16 %v214
      %v376 = vunpack.c.l.b16 %v215
      %v377 = vunpack.c.l.b16 %v216
      %v378 = vunpack.c.l.b16 %v217
      %v379 = vunpack.c.l.b16 %v218
      %v380 = vunpack.c.l.b16 %v219
      %v381 = vunpack.c.l.b16 %v220
      %v382 = vunpack.c.l.b16 %v221
      %v383 = vunpack.c.l.b16 %v222
      %v384 = vunpack.c.l.b16 %v223
      %v385 = vunpack.c.l.b16 %v224
      %v386 = vunpack.c.l.b16 %v225
      %v387 = vunpack.c.l.b16 %v226
      %v388 = vunpack.c.l.b16 %v227
      %v389 = vunpack.c.l.b16 %v228
      %v390 = vunpack.c.l.b16 %v229
      %v391 = vunpack.c.l.b16 %v230
      %v392 = vunpack.c.l.b16 %v231
      %v393 = vunpack.c.l.b16 %v232
      %v394 = vunpack.c.l.b16 %v233
      %v395 = vunpack.c.l.b16 %v234
      %v396 = vunpack.c.l.b16 %v235
      %v397 = vunpack.c.l.b16 %v236
      %v398 = vunpack.c.l.b16 %v237
      %v399 = vunpack.c.l.b16 %v238
      %v400 = vunpack.c.l.b16 %v239
      %v401 = vunpack.c.l.b16 %v240
      %v402 = vunpack.c.l.b16 %v241
      %v403 = vunpack.c.l.b16 %v242
      %v404 = vunpack.c.l.b16 %v243
      %v405 = vunpack.c.l.b16 %v244
      %v406 = vunpack.c.l.b16 %v245
      %v407 = vunpack.c.l.b16 %v246
      %v408 = vunpack.c.l.b16 %v247
      %v409 = vunpack.c.l.b16 %v248
      %v410 = vunpack.c.l.b16 %v249
      %v411 = vunpack.c.l.b16 %v250
      %v412 = vunpack.c.l.b16 %v251
      %v413 = vunpack.c.l.b16 %v252
      %v414 = vunpack.c.l.b16 %v253
      %v415 = vunpack.c.l.b16 %v254
      %v416 = vunpack.c.l.b16 %v255
      %v417 = vunpack.c.l.b16 %v256
      %v418 = vunpack.c.l.b16 %v257
      %v419 = vunpack.c.l.b16 %v258
      %v420 = vpack.c.b16 %v341, %v340
      %v421 = vpack.c.b16 %v343, %v342
      %v422 = vpack.c.b16 %v345, %v344
      %v423 = vpack.c.b16 %v347, %v346
      %v424 = vpack.c.b16 %v349, %v348
      %v425 = vpack.c.b16 %v351, %v350
      %v426 = vpack.c.b16 %v353, %v352
      %v427 = vpack.c.b16 %v355, %v354
      %v428 = vpack.c.b16 %v357, %v356
      %v429 = vpack.c.b16 %v359, %v358
      %v430 = vpack.c.b16 %v361, %v360
      %v431 = vpack.c.b16 %v363, %v362
      %v432 = vpack.c.b16 %v365, %v364
      %v433 = vpack.c.b16 %v367, %v366
      %v434 = vpack.c.b16 %v369, %v368
      %v435 = vpack.c.b16 %v371, %v370
      %v436 = vpack.c.b16 %v373, %v372
      %v437 = vpack.c.b16 %v375, %v374
      %v438 = vpack.c.b16 %v377, %v376
      %v439 = vpack.c.b16 %v379, %v378
      %v440 = vpack.c.b16 %v381, %v380
      %v441 = vpack.c.b16 %v383, %v382
      %v442 = vpack.c.b16 %v385, %v384
      %v443 = vpack.c.b16 %v387, %v386
      %v444 = vpack.c.b16 %v389, %v388
      %v445 = vpack.c.b16 %v391, %v390
      %v446 = vpack.c.b16 %v393, %v392
      %v447 = vpack.c.b16 %v395, %v394
      %v448 = vpack.c.b16 %v397, %v396
      %v449 = vpack.c.b16 %v399, %v398
      %v450 = vpack.c.b16 %v401, %v400
      %v451 = vpack.c.b16 %v403, %v402
      %v452 = vpack.c.b16 %v405, %v404
      %v453 = vpack.c.b16 %v407, %v406
      %v454 = vpack.c.b16 %v409, %v408
      %v455 = vpack.c.b16 %v411, %v410
      %v456 = vpack.c.b16 %v413, %v412
      %v457 = vpack.c.b16 %v415, %v414
      %v458 = vpack.c.b16 %v417, %v416
      %v459 = vpack.c.b16 %v419, %v418
      %500 = vmatpush.bf16.msra.mxu0 %v427
      %501 = vmatpush.bf16.msra.mxu0 %v426
      %502 = vmatpush.bf16.msra.mxu0 %v425
      %503 = vmatpush.bf16.msra.mxu0 %v424
      %504 = vmatpush.bf16.msra.mxu0 %v423
      %505 = vmatpush.bf16.msra.mxu0 %v422
      %506 = vmatpush.bf16.msra.mxu0 %v421
      %507 = vmatpush.bf16.msra.mxu0 %v420
      %508 = vmatmul.bf16.gmra.mxu0 %v174
      %v509 = vpop.f32.mrf.mxu0
      %v510 = vadd.f32 %v259, %v509
      %v511 = vpop.f32.mrf.mxu0
      %512 = vdwg.mxu0
      %513 = vmatpush.bf16.msra.mxu0 %v435
      %514 = vmatpush.bf16.msra.mxu0 %v434
      %515 = vmatpush.bf16.msra.mxu0 %v433
      %516 = vmatpush.bf16.msra.mxu0 %v432
      %517 = vmatpush.bf16.msra.mxu0 %v431
      %518 = vmatpush.bf16.msra.mxu0 %v430
      %519 = vmatpush.bf16.msra.mxu0 %v429
      %520 = vmatpush.bf16.msra.mxu0 %v428
      %521 = vmatmul.bf16.gmra.mxu0 %v175
      %v522 = vpop.f32.mrf.mxu0
      %v523 = vadd.f32 %v510, %v522
      %v524 = vpop.f32.mrf.mxu0
      %525 = vdwg.mxu0
      %526 = vmatpush.bf16.msra.mxu0 %v443
      %527 = vmatpush.bf16.msra.mxu0 %v442
      %528 = vmatpush.bf16.msra.mxu0 %v441
      %529 = vmatpush.bf16.msra.mxu0 %v440
      %530 = vmatpush.bf16.msra.mxu0 %v439
      %531 = vmatpush.bf16.msra.mxu0 %v438
      %532 = vmatpush.bf16.msra.mxu0 %v437
      %533 = vmatpush.bf16.msra.mxu0 %v436
      %534 = vmatmul.bf16.gmra.mxu0 %v176
      %v535 = vpop.f32.mrf.mxu0
      %v536 = vadd.f32 %v523, %v535
      %v537 = vpop.f32.mrf.mxu0
      %538 = vdwg.mxu0
      %539 = vmatpush.bf16.msra.mxu0 %v451
      %540 = vmatpush.bf16.msra.mxu0 %v450
      %541 = vmatpush.bf16.msra.mxu0 %v449
      %542 = vmatpush.bf16.msra.mxu0 %v448
      %543 = vmatpush.bf16.msra.mxu0 %v447
      %544 = vmatpush.bf16.msra.mxu0 %v446
      %545 = vmatpush.bf16.msra.mxu0 %v445
      %546 = vmatpush.bf16.msra.mxu0 %v444
      %547 = vmatmul.bf16.gmra.mxu0 %v177
      %v548 = vpop.f32.mrf.mxu0
      %v549 = vadd.f32 %v536, %v548
      %v550 = vpop.f32.mrf.mxu0
      %551 = vdwg.mxu0
      %552 = vmatpush.bf16.msra.mxu0 %v459
      %553 = vmatpush.bf16.msra.mxu0 %v458
      %554 = vmatpush.bf16.msra.mxu0 %v457
      %555 = vmatpush.bf16.msra.mxu0 %v456
      %556 = vmatpush.bf16.msra.mxu0 %v455
      %557 = vmatpush.bf16.msra.mxu0 %v454
      %558 = vmatpush.bf16.msra.mxu0 %v453
      %559 = vmatpush.bf16.msra.mxu0 %v452
      %560 = vmatmul.bf16.gmra.mxu0 %v178
      %v561 = vpop.f32.mrf.mxu0
      %v562 = vadd.f32 %v549, %v561
      %v563 = vpop.f32.mrf.mxu0
      %564 = vdwg.mxu0
      %vm565 = vcmask 523264
      %566 = vst.msk [vmem:[%s168] sm:$0xff] %vm565, %v562
      %p567 = scmp.lt.s32.totalorder %s14, 1
      %s568 = scalar_select %p567, %s14, 1
      %s569 = smul.addr %s568, 8
      %s570 = scalar_lea.vmem %s3, %s569
      // Predicated region
      $region33: #{vit_forward.2} parent=31 // pred_check
        %p571 = pneg %p100
      $region34: #{vit_forward.2} parent=31 // pred_check_branch
        %573 = sbr.rel (%p571) target = $region36
      $region35: #{vit_forward.2} parent=31 // pred_region
        _
      $region36: #{vit_forward.2} parent=31 // pred_fallthru
        _
    $region32: #{vit_forward.2} parent=5 // pred_fallthru
      _
    %p574 = scmp.le.s32.totalorder 2, %s9
    // Predicated region
    $region37: #{vit_forward.2} parent=5 // pred_check
      %p575 = pneg %p574
    $region38: #{vit_forward.2} parent=5 // pred_check_branch
      %577 = sbr.rel (%p575) target = $region40
    $region39: #{vit_forward.2} parent=5 // pred_region
      %s578 = ssub.s32 %s9, 2
      // Predicated region
      $region41: #{vit_forward.2} parent=39 // pred_check
        %p579 = pneg %p106
      $region42: #{vit_forward.2} parent=39 // pred_check_branch
        %581 = sbr.rel (%p579) target = $region44
      $region43: #{vit_forward.2} parent=39 // pred_region
        %p582 = scmp.lt.s32.totalorder %s15, 1
        %s583 = scalar_select %p582, %s15, 1
        %s584 = smul.addr %s583, 8
        %s585 = scalar_lea.vmem %s3, %s584
      $region44: #{vit_forward.2} parent=39 // pred_fallthru
        _
    $region40: #{vit_forward.2} parent=5 // pred_fallthru
      _
  $region6: #{vit_forward.2} parent=0 // loop_footer
    %s13 = sadd.s32 1, %s9
  $region7: #{vit_forward.2} parent=0 // loop_footer_branch
    %8 = sbr.rel target = $region3
  $region8: #{vit_forward.2} parent=0 // loop_exit
    _

// kernel: vit_forward.3
$region0: #{vit_forward.3}
  #allocation0 [shape = 'u32[]', space=smem, size = 0x4, offset = 0x4, fixed_abs, tag = 'smem constant byte address 0x4 - core index']
  #allocation1 [shape = 'u32[72,128]{1,0:T(1,128)}', space=vmem, size = 0x9000, scoped, tag = 'internal scratch']
  #allocation2 [shape = 'f32[8,64]{1,0:T(8,128)}', space=vmem, size = 0x1000, scoped, tag = 'scratch operand']
  %s0 = inlined_call_operand.vmem [shape: f32[16,64], index: 0, kind: input, shape index: {}]
  %s1 = inlined_call_operand.vmem [shape: f32[2,16,256], index: 1, kind: input, shape index: {}]
  %s2 = inlined_call_operand.vmem [shape: bf16[2,64,64], index: 2, kind: input, shape index: {}]
  %s3 = inlined_call_operand.vmem [shape: bf16[2,64,64], index: 3, kind: input, shape index: {}]
  %s4 = inlined_call_operand.vmem [shape: bf16[2,64,64], index: 4, kind: input, shape index: {}]
  %s5 = inlined_call_operand.vmem [shape: bf16[2,64,64], index: 5, kind: input, shape index: {}]
  %s6 = inlined_call_operand.vmem [shape: bf16[2,64,256], index: 6, kind: input, shape index: {}]
  %s7 = inlined_call_operand.vmem [shape: bf16[2,256,64], index: 7, kind: input, shape index: {}]
  %s8 = inlined_call_operand.vmem [shape: f32[1,64], index: 8, kind: input, shape index: {}]
  %s9 = inlined_call_operand.vmem [shape: f32[1,64], index: 9, kind: input, shape index: {}]
  %s10 = inlined_call_operand.vmem [shape: f32[16,64], index: 10, kind: output, shape index: {}]
  %s11 = sld [smem:[#allocation0]]
  $region81: #{vit_forward.3} parent=0
    _
  %s13 = ssub.s32 1, %s11
  %s14 = scalar_select 0, %s13, %s11
  loop: start=0, step=1, limit=6
  $region2: #{vit_forward.3} parent=0 // loop_pre_header
    _
  $region3: #{vit_forward.3} parent=0 // loop_header
    %s16 = sphi 0, %s20
    %p17 = scmp.ge.s32.totalorder %s16, 6
    %s23 = sphi 0, %s35
    %s24 = sphi 0, %s31
    %s25 = sphi 0, %s23
    %s26 = sphi 0, %s24
    %s27 = sphi 0, %s25
    %s28 = sphi 0, %s26
    %s38 = sphi 0, %s40
    %s41 = sphi 0, %s38
    %s42 = sphi 0, %s41
    %s58 = sphi 0, %s42
    %s64 = sphi 0, %s66
    %s67 = sphi 0, %s64
    %s68 = sphi 0, %s67
    %s84 = sphi 0, %s68
    %s90 = sphi 0, %s92
    %s93 = sphi 0, %s90
    %s94 = sphi 0, %s93
    %s110 = sphi 0, %s94
    %s116 = sphi 0, %s118
    %s119 = sphi 0, %s116
    %s120 = sphi 0, %s119
    %s136 = sphi 0, %s120
    %s142 = sphi 0, %s144
    %s145 = sphi 0, %s142
    %s146 = sphi 0, %s145
    %s162 = sphi 0, %s146
    %s168 = sphi 0, %s170
    %s171 = sphi 0, %s168
    %s172 = sphi 0, %s171
    %s188 = sphi 0, %s172
    %s194 = sphi 0, %s196
    %s197 = sphi 0, %s194
    %s198 = sphi 0, %s197
    %s214 = sphi 0, %s198
    %s220 = sphi 0, %s222
    %s223 = sphi 0, %s220
    %s224 = sphi 0, %s223
    %s240 = sphi 0, %s224
    %s244 = sphi 0, %s244
    %s246 = sphi 0, %s244
    %s247 = sphi 0, %s246
    %s261 = sphi 0, %s247
    %s265 = sphi 0, %s265
    %s267 = sphi 0, %s265
    %s268 = sphi 0, %s267
    %s282 = sphi 0, %s268
    %s288 = sphi 0, %s290
    %s291 = sphi 0, %s288
    %s292 = sphi 0, %s291
    %s308 = sphi 0, %s292
  $region4: #{vit_forward.3} parent=0 // loop_header_branch
    %19 = sbr.rel (%p17) target = $region8
  $region5: #{vit_forward.3} parent=0 // loop_body
    %s21 = ssub.s32 %s16, 1
    %s22 = ssub.s32 %s16, 2
    %s29 = sadd.s32 1, %s24
    %p30 = scmp.ge.s32.totalorder %s29, 2
    %s31 = scalar_select %p30, 0, %s29
    %s32 = sadd.s32 1, %s23
    %s33 = scalar_select %p30, %s32, %s23
    %p34 = scmp.ge.s32.totalorder %s33, 2
    %s35 = scalar_select %p34, 0, %s33
    %s36 = ssub.s32 %s23, %s35
    %p37 = scmp.eq.s32.totalorder %s36, 0
    %s39 = sadd.s32 %s38, 1
    %s40 = scalar_select %p37, %s38, %s39
    %p43 = pneg %p37
    %p44 = scmp.eq.s32.totalorder %s16, 3
    %p45 = por %p43, %p44
    %p46 = scmp.ne.s32.totalorder %s38, %s41
    %p47 = scmp.eq.s32.totalorder %s16, 0
    %p48 = por %p46, %p47
    %p49 = scmp.ne.s32.totalorder %s38, %s41
    %p50 = scmp.eq.s32.totalorder %s21, 3
    %p51 = por %p49, %p50
    %p52 = scmp.ne.s32.totalorder %s41, %s42
    %p53 = scmp.eq.s32.totalorder %s21, 0
    %p54 = por %p52, %p53
    %p55 = scmp.ne.s32.totalorder %s41, %s42
    %p56 = scmp.eq.s32.totalorder %s22, 3
    %p57 = por %p55, %p56
    %p59 = scmp.ne.s32.totalorder %s42, %s58
    %p60 = scmp.eq.s32.totalorder %s22, 0
    %p61 = por %p59, %p60
    %s62 = ssub.s32 %s24, %s31
    %p63 = scmp.eq.s32.totalorder %s62, 0
    %s65 = sadd.s32 %s64, 1
    %s66 = scalar_select %p63, %s64, %s65
    %p69 = pneg %p63
    %p70 = scmp.eq.s32.totalorder %s16, 3
    %p71 = por %p69, %p70
    %p72 = scmp.ne.s32.totalorder %s64, %s67
    %p73 = scmp.eq.s32.totalorder %s16, 0
    %p74 = por %p72, %p73
    %p75 = scmp.ne.s32.totalorder %s64, %s67
    %p76 = scmp.eq.s32.totalorder %s21, 3
    %p77 = por %p75, %p76
    %p78 = scmp.ne.s32.totalorder %s67, %s68
    %p79 = scmp.eq.s32.totalorder %s21, 0
    %p80 = por %p78, %p79
    %p81 = scmp.ne.s32.totalorder %s67, %s68
    %p82 = scmp.eq.s32.totalorder %s22, 3
    %p83 = por %p81, %p82
    %p85 = scmp.ne.s32.totalorder %s68, %s84
    %p86 = scmp.eq.s32.totalorder %s22, 0
    %p87 = por %p85, %p86
    %s88 = ssub.s32 %s24, %s31
    %p89 = scmp.eq.s32.totalorder %s88, 0
    %s91 = sadd.s32 %s90, 1
    %s92 = scalar_select %p89, %s90, %s91
    %p95 = pneg %p89
    %p96 = scmp.eq.s32.totalorder %s16, 3
    %p97 = por %p95, %p96
    %p98 = scmp.ne.s32.totalorder %s90, %s93
    %p99 = scmp.eq.s32.totalorder %s16, 0
    %p100 = por %p98, %p99
    %p101 = scmp.ne.s32.totalorder %s90, %s93
    %p102 = scmp.eq.s32.totalorder %s21, 3
    %p103 = por %p101, %p102
    %p104 = scmp.ne.s32.totalorder %s93, %s94
    %p105 = scmp.eq.s32.totalorder %s21, 0
    %p106 = por %p104, %p105
    %p107 = scmp.ne.s32.totalorder %s93, %s94
    %p108 = scmp.eq.s32.totalorder %s22, 3
    %p109 = por %p107, %p108
    %p111 = scmp.ne.s32.totalorder %s94, %s110
    %p112 = scmp.eq.s32.totalorder %s22, 0
    %p113 = por %p111, %p112
    %s114 = ssub.s32 %s24, %s31
    %p115 = scmp.eq.s32.totalorder %s114, 0
    %s117 = sadd.s32 %s116, 1
    %s118 = scalar_select %p115, %s116, %s117
    %p121 = pneg %p115
    %p122 = scmp.eq.s32.totalorder %s16, 3
    %p123 = por %p121, %p122
    %p124 = scmp.ne.s32.totalorder %s116, %s119
    %p125 = scmp.eq.s32.totalorder %s16, 0
    %p126 = por %p124, %p125
    %p127 = scmp.ne.s32.totalorder %s116, %s119
    %p128 = scmp.eq.s32.totalorder %s21, 3
    %p129 = por %p127, %p128
    %p130 = scmp.ne.s32.totalorder %s119, %s120
    %p131 = scmp.eq.s32.totalorder %s21, 0
    %p132 = por %p130, %p131
    %p133 = scmp.ne.s32.totalorder %s119, %s120
    %p134 = scmp.eq.s32.totalorder %s22, 3
    %p135 = por %p133, %p134
    %p137 = scmp.ne.s32.totalorder %s120, %s136
    %p138 = scmp.eq.s32.totalorder %s22, 0
    %p139 = por %p137, %p138
    %s140 = ssub.s32 %s24, %s31
    %p141 = scmp.eq.s32.totalorder %s140, 0
    %s143 = sadd.s32 %s142, 1
    %s144 = scalar_select %p141, %s142, %s143
    %p147 = pneg %p141
    %p148 = scmp.eq.s32.totalorder %s16, 3
    %p149 = por %p147, %p148
    %p150 = scmp.ne.s32.totalorder %s142, %s145
    %p151 = scmp.eq.s32.totalorder %s16, 0
    %p152 = por %p150, %p151
    %p153 = scmp.ne.s32.totalorder %s142, %s145
    %p154 = scmp.eq.s32.totalorder %s21, 3
    %p155 = por %p153, %p154
    %p156 = scmp.ne.s32.totalorder %s145, %s146
    %p157 = scmp.eq.s32.totalorder %s21, 0
    %p158 = por %p156, %p157
    %p159 = scmp.ne.s32.totalorder %s145, %s146
    %p160 = scmp.eq.s32.totalorder %s22, 3
    %p161 = por %p159, %p160
    %p163 = scmp.ne.s32.totalorder %s146, %s162
    %p164 = scmp.eq.s32.totalorder %s22, 0
    %p165 = por %p163, %p164
    %s166 = ssub.s32 %s24, %s31
    %p167 = scmp.eq.s32.totalorder %s166, 0
    %s169 = sadd.s32 %s168, 1
    %s170 = scalar_select %p167, %s168, %s169
    %p173 = pneg %p167
    %p174 = scmp.eq.s32.totalorder %s16, 3
    %p175 = por %p173, %p174
    %p176 = scmp.ne.s32.totalorder %s168, %s171
    %p177 = scmp.eq.s32.totalorder %s16, 0
    %p178 = por %p176, %p177
    %p179 = scmp.ne.s32.totalorder %s168, %s171
    %p180 = scmp.eq.s32.totalorder %s21, 3
    %p181 = por %p179, %p180
    %p182 = scmp.ne.s32.totalorder %s171, %s172
    %p183 = scmp.eq.s32.totalorder %s21, 0
    %p184 = por %p182, %p183
    %p185 = scmp.ne.s32.totalorder %s171, %s172
    %p186 = scmp.eq.s32.totalorder %s22, 3
    %p187 = por %p185, %p186
    %p189 = scmp.ne.s32.totalorder %s172, %s188
    %p190 = scmp.eq.s32.totalorder %s22, 0
    %p191 = por %p189, %p190
    %s192 = ssub.s32 %s24, %s31
    %p193 = scmp.eq.s32.totalorder %s192, 0
    %s195 = sadd.s32 %s194, 1
    %s196 = scalar_select %p193, %s194, %s195
    %p199 = pneg %p193
    %p200 = scmp.eq.s32.totalorder %s16, 3
    %p201 = por %p199, %p200
    %p202 = scmp.ne.s32.totalorder %s194, %s197
    %p203 = scmp.eq.s32.totalorder %s16, 0
    %p204 = por %p202, %p203
    %p205 = scmp.ne.s32.totalorder %s194, %s197
    %p206 = scmp.eq.s32.totalorder %s21, 3
    %p207 = por %p205, %p206
    %p208 = scmp.ne.s32.totalorder %s197, %s198
    %p209 = scmp.eq.s32.totalorder %s21, 0
    %p210 = por %p208, %p209
    %p211 = scmp.ne.s32.totalorder %s197, %s198
    %p212 = scmp.eq.s32.totalorder %s22, 3
    %p213 = por %p211, %p212
    %p215 = scmp.ne.s32.totalorder %s198, %s214
    %p216 = scmp.eq.s32.totalorder %s22, 0
    %p217 = por %p215, %p216
    %s218 = ssub.s32 %s24, %s31
    %p219 = scmp.eq.s32.totalorder %s218, 0
    %s221 = sadd.s32 %s220, 1
    %s222 = scalar_select %p219, %s220, %s221
    %p225 = pneg %p219
    %p226 = scmp.eq.s32.totalorder %s16, 3
    %p227 = por %p225, %p226
    %p228 = scmp.ne.s32.totalorder %s220, %s223
    %p229 = scmp.eq.s32.totalorder %s16, 0
    %p230 = por %p228, %p229
    %p231 = scmp.ne.s32.totalorder %s220, %s223
    %p232 = scmp.eq.s32.totalorder %s21, 3
    %p233 = por %p231, %p232
    %p234 = scmp.ne.s32.totalorder %s223, %s224
    %p235 = scmp.eq.s32.totalorder %s21, 0
    %p236 = por %p234, %p235
    %p237 = scmp.ne.s32.totalorder %s223, %s224
    %p238 = scmp.eq.s32.totalorder %s22, 3
    %p239 = por %p237, %p238
    %p241 = scmp.ne.s32.totalorder %s224, %s240
    %p242 = scmp.eq.s32.totalorder %s22, 0
    %p243 = por %p241, %p242
    %s245 = sadd.s32 %s244, 1
    %p248 = scmp.eq.s32.totalorder %s16, 3
    %p249 = scmp.ne.s32.totalorder %s244, %s246
    %p250 = scmp.eq.s32.totalorder %s16, 0
    %p251 = por %p249, %p250
    %p252 = scmp.ne.s32.totalorder %s244, %s246
    %p253 = scmp.eq.s32.totalorder %s21, 3
    %p254 = por %p252, %p253
    %p255 = scmp.ne.s32.totalorder %s246, %s247
    %p256 = scmp.eq.s32.totalorder %s21, 0
    %p257 = por %p255, %p256
    %p258 = scmp.ne.s32.totalorder %s246, %s247
    %p259 = scmp.eq.s32.totalorder %s22, 3
    %p260 = por %p258, %p259
    %p262 = scmp.ne.s32.totalorder %s247, %s261
    %p263 = scmp.eq.s32.totalorder %s22, 0
    %p264 = por %p262, %p263
    %s266 = sadd.s32 %s265, 1
    %p269 = scmp.eq.s32.totalorder %s16, 3
    %p270 = scmp.ne.s32.totalorder %s265, %s267
    %p271 = scmp.eq.s32.totalorder %s16, 0
    %p272 = por %p270, %p271
    %p273 = scmp.ne.s32.totalorder %s265, %s267
    %p274 = scmp.eq.s32.totalorder %s21, 3
    %p275 = por %p273, %p274
    %p276 = scmp.ne.s32.totalorder %s267, %s268
    %p277 = scmp.eq.s32.totalorder %s21, 0
    %p278 = por %p276, %p277
    %p279 = scmp.ne.s32.totalorder %s267, %s268
    %p280 = scmp.eq.s32.totalorder %s22, 3
    %p281 = por %p279, %p280
    %p283 = scmp.ne.s32.totalorder %s268, %s282
    %p284 = scmp.eq.s32.totalorder %s22, 0
    %p285 = por %p283, %p284
    %s286 = ssub.s32 %s23, %s35
    %p287 = scmp.eq.s32.totalorder %s286, 0
    %s289 = sadd.s32 %s288, 1
    %s290 = scalar_select %p287, %s288, %s289
    %p293 = pneg %p287
    %p294 = scmp.eq.s32.totalorder %s16, 3
    %p295 = por %p293, %p294
    %p296 = scmp.ne.s32.totalorder %s288, %s291
    %p297 = scmp.eq.s32.totalorder %s16, 0
    %p298 = por %p296, %p297
    %p299 = scmp.ne.s32.totalorder %s288, %s291
    %p300 = scmp.eq.s32.totalorder %s21, 3
    %p301 = por %p299, %p300
    %p302 = scmp.ne.s32.totalorder %s291, %s292
    %p303 = scmp.eq.s32.totalorder %s21, 0
    %p304 = por %p302, %p303
    %p305 = scmp.ne.s32.totalorder %s291, %s292
    %p306 = scmp.eq.s32.totalorder %s22, 3
    %p307 = por %p305, %p306
    %p309 = scmp.ne.s32.totalorder %s292, %s308
    %p310 = scmp.eq.s32.totalorder %s22, 0
    %p311 = por %p309, %p310
    %p312 = scmp.le.s32.totalorder 1, %s16
    %p313 = scmp.lt.s32.totalorder %s16, 5
    %p314 = pnand %p312, %p313
    %p315 = pneg %p314
    // Predicated region
    $region9: #{vit_forward.3} parent=5 // pred_check
      _
    $region10: #{vit_forward.3} parent=5 // pred_check_branch
      %317 = sbr.rel (%p314) target = $region12
    $region11: #{vit_forward.3} parent=5 // pred_region
      %s318 = ssub.s32 %s16, 1
      // Predicated region
      $region13: #{vit_forward.3} parent=11 // pred_check
        %p319 = pneg %p257
      $region14: #{vit_forward.3} parent=11 // pred_check_branch
        %321 = sbr.rel (%p319) target = $region16
      $region15: #{vit_forward.3} parent=11 // pred_region
        _
      $region16: #{vit_forward.3} parent=11 // pred_fallthru
        _
      // Predicated region
      $region17: #{vit_forward.3} parent=11 // pred_check
        %p322 = pneg %p278
      $region18: #{vit_forward.3} parent=11 // pred_check_branch
        %324 = sbr.rel (%p322) target = $region20
      $region19: #{vit_forward.3} parent=11 // pred_region
        _
      $region20: #{vit_forward.3} parent=11 // pred_fallthru
        _
    $region12: #{vit_forward.3} parent=5 // pred_fallthru
      _
    %p325 = scmp.lt.s32.totalorder %s16, 4
    // Predicated region
    $region21: #{vit_forward.3} parent=5 // pred_check
      %p326 = pneg %p325
    $region22: #{vit_forward.3} parent=5 // pred_check_branch
      %328 = sbr.rel (%p326) target = $region24
    $region23: #{vit_forward.3} parent=5 // pred_region
      // Predicated region
      $region25: #{vit_forward.3} parent=23 // pred_check
        %p329 = pneg %p48
      $region26: #{vit_forward.3} parent=23 // pred_check_branch
        %331 = sbr.rel (%p329) target = $region28
      $region27: #{vit_forward.3} parent=23 // pred_region
        %p332 = scmp.lt.s32.totalorder %s23, 1
        %s333 = scalar_select %p332, %s23, 1
        %s334 = smul.addr %s333, 8
        %s335 = scalar_lea.vmem %s0, %s334
      $region28: #{vit_forward.3} parent=23 // pred_fallthru
        _
      // Predicated region
      $region29: #{vit_forward.3} parent=23 // pred_check
        %p336 = pneg %p74
      $region30: #{vit_forward.3} parent=23 // pred_check_branch
        %338 = sbr.rel (%p336) target = $region32
      $region31: #{vit_forward.3} parent=23 // pred_region
        %p339 = scmp.lt.s32.totalorder %s24, 1
        %s340 = scalar_select %p339, %s24, 1
        %s341 = smul.addr %s340, 4
        %s342 = smul.addr %s341, 8
        %s343 = scalar_lea.vmem %s1, %s342
      $region32: #{vit_forward.3} parent=23 // pred_fallthru
        _
      // Predicated region
      $region33: #{vit_forward.3} parent=23 // pred_check
        %p344 = pneg %p100
      $region34: #{vit_forward.3} parent=23 // pred_check_branch
        %346 = sbr.rel (%p344) target = $region36
      $region35: #{vit_forward.3} parent=23 // pred_region
        %p347 = scmp.lt.s32.totalorder %s24, 1
        %s348 = scalar_select %p347, %s24, 1
        %s349 = smul.addr %s348, 8
        %s350 = smul.addr %s349, 4
        %s351 = scalar_lea.vmem %s2, %s350
      $region36: #{vit_forward.3} parent=23 // pred_fallthru
        _
      // Predicated region
      $region37: #{vit_forward.3} parent=23 // pred_check
        %p352 = pneg %p126
      $region38: #{vit_forward.3} parent=23 // pred_check_branch
        %354 = sbr.rel (%p352) target = $region40
      $region39: #{vit_forward.3} parent=23 // pred_region
        %p355 = scmp.lt.s32.totalorder %s24, 1
        %s356 = scalar_select %p355, %s24, 1
        %s357 = smul.addr %s356, 8
        %s358 = smul.addr %s357, 4
        %s359 = scalar_lea.vmem %s3, %s358
      $region40: #{vit_forward.3} parent=23 // pred_fallthru
        _
      // Predicated region
      $region41: #{vit_forward.3} parent=23 // pred_check
        %p360 = pneg %p152
      $region42: #{vit_forward.3} parent=23 // pred_check_branch
        %362 = sbr.rel (%p360) target = $region44
      $region43: #{vit_forward.3} parent=23 // pred_region
        %p363 = scmp.lt.s32.totalorder %s24, 1
        %s364 = scalar_select %p363, %s24, 1
        %s365 = smul.addr %s364, 8
        %s366 = smul.addr %s365, 4
        %s367 = scalar_lea.vmem %s4, %s366
      $region44: #{vit_forward.3} parent=23 // pred_fallthru
        _
      // Predicated region
      $region45: #{vit_forward.3} parent=23 // pred_check
        %p368 = pneg %p178
      $region46: #{vit_forward.3} parent=23 // pred_check_branch
        %370 = sbr.rel (%p368) target = $region48
      $region47: #{vit_forward.3} parent=23 // pred_region
        %p371 = scmp.lt.s32.totalorder %s24, 1
        %s372 = scalar_select %p371, %s24, 1
        %s373 = smul.addr %s372, 8
        %s374 = smul.addr %s373, 4
        %s375 = scalar_lea.vmem %s5, %s374
      $region48: #{vit_forward.3} parent=23 // pred_fallthru
        _
      // Predicated region
      $region49: #{vit_forward.3} parent=23 // pred_check
        %p376 = pneg %p204
      $region50: #{vit_forward.3} parent=23 // pred_check_branch
        %378 = sbr.rel (%p376) target = $region52
      $region51: #{vit_forward.3} parent=23 // pred_region
        %p379 = scmp.lt.s32.totalorder %s24, 1
        %s380 = scalar_select %p379, %s24, 1
        %s381 = smul.addr %s380, 16
        %s382 = smul.addr %s381, 4
        %s383 = scalar_lea.vmem %s6, %s382
      $region52: #{vit_forward.3} parent=23 // pred_fallthru
        _
      // Predicated region
      $region53: #{vit_forward.3} parent=23 // pred_check
        %p384 = pneg %p230
      $region54: #{vit_forward.3} parent=23 // pred_check_branch
        %386 = sbr.rel (%p384) target = $region56
      $region55: #{vit_forward.3} parent=23 // pred_region
        %p387 = scmp.lt.s32.totalorder %s24, 1
        %s388 = scalar_select %p387, %s24, 1
        %s389 = smul.addr %s388, 32
        %s390 = smul.addr %s389, 4
        %s391 = scalar_lea.vmem %s7, %s390
      $region56: #{vit_forward.3} parent=23 // pred_fallthru
        _
    $region24: #{vit_forward.3} parent=5 // pred_fallthru
      _
    %p392 = scmp.le.s32.totalorder 1, %s16
    %p393 = scmp.lt.s32.totalorder %s16, 5
    %p394 = pnand %p392, %p393
    %p395 = pneg %p394
    // Predicated region
    $region57: #{vit_forward.3} parent=5 // pred_check
      _
    $region58: #{vit_forward.3} parent=5 // pred_check_branch
      %397 = sbr.rel (%p394) target = $region60
    $region59: #{vit_forward.3} parent=5 // pred_region
      %s398 = ssub.s32 %s16, 1
      %p399 = scmp.lt.s32.totalorder %s25, 1
      %s400 = scalar_select %p399, %s25, 1
      %s401 = smul.addr %s400, 8
      %s402 = scalar_lea.vmem %s0, %s401
      %p403 = pneg %p54
      %p404 = pneg %p51
      %p405 = scmp.lt.s32.totalorder %s26, 1
      %s406 = scalar_select %p405, %s26, 1
      %s407 = smul.addr %s406, 4
      %s408 = smul.addr %s407, 8
      %s409 = scalar_lea.vmem %s1, %s408
      %p410 = pneg %p80
      %p411 = pneg %p77
      %p412 = scmp.lt.s32.totalorder %s26, 1
      %s413 = scalar_select %p412, %s26, 1
      %s414 = smul.addr %s413, 8
      %s415 = smul.addr %s414, 4
      %s416 = scalar_lea.vmem %s2, %s415
      %p417 = pneg %p106
      %p418 = pneg %p103
      %p419 = scmp.lt.s32.totalorder %s26, 1
      %s420 = scalar_select %p419, %s26, 1
      %s421 = smul.addr %s420, 8
      %s422 = smul.addr %s421, 4
      %s423 = scalar_lea.vmem %s3, %s422
      %p424 = pneg %p132
      %p425 = pneg %p129
      %p426 = scmp.lt.s32.totalorder %s26, 1
      %s427 = scalar_select %p426, %s26, 1
      %s428 = smul.addr %s427, 8
      %s429 = smul.addr %s428, 4
      %s430 = scalar_lea.vmem %s4, %s429
      %p431 = pneg %p158
      %p432 = pneg %p155
      %p433 = scmp.lt.s32.totalorder %s26, 1
      %s434 = scalar_select %p433, %s26, 1
      %s435 = smul.addr %s434, 8
      %s436 = smul.addr %s435, 4
      %s437 = scalar_lea.vmem %s5, %s436
      %p438 = pneg %p184
      %p439 = pneg %p181
      %p440 = scmp.lt.s32.totalorder %s26, 1
      %s441 = scalar_select %p440, %s26, 1
      %s442 = smul.addr %s441, 16
      %s443 = smul.addr %s442, 4
      %s444 = scalar_lea.vmem %s6, %s443
      %p445 = pneg %p210
      %p446 = pneg %p207
      %p447 = scmp.lt.s32.totalorder %s26, 1
      %s448 = scalar_select %p447, %s26, 1
      %s449 = smul.addr %s448, 32
      %s450 = smul.addr %s449, 4
      %s451 = scalar_lea.vmem %s7, %s450
      %p452 = pneg %p236
      %p453 = pneg %p233
      %p454 = pneg %p257
      %p455 = pneg %p254
      %p456 = pneg %p278
      %p457 = pneg %p275
      %p458 = pneg %p304
      %p459 = pneg %p301
      %p460 = scmp.lt.s32.totalorder %s25, 1
      %s461 = scalar_select %p460, %s25, 1
      %s462 = smul.addr %s461, 8
      %s463 = scalar_lea.vmem %s10, %s462
      %p464 = scmp.lt.s32.totalorder %s25, 1
      %s465 = scalar_select %p464, %s25, 1
      %s466 = smul.addr %s465, 8
      %s467 = scalar_lea.vmem %s0, %s466
      %p468 = scmp.lt.s32.totalorder %s26, 1
      %s469 = scalar_select %p468, %s26, 1
      %s470 = smul.addr %s469, 4
      %s471 = smul.addr %s470, 8
      %s472 = scalar_lea.vmem %s1, %s471
      %p473 = scmp.lt.s32.totalorder %s26, 1
      %s474 = scalar_select %p473, %s26, 1
      %s475 = smul.addr %s474, 8
      %s476 = smul.addr %s475, 4
      %s477 = scalar_lea.vmem %s2, %s476
      %p478 = scmp.lt.s32.totalorder %s26, 1
      %s479 = scalar_select %p478, %s26, 1
      %s480 = smul.addr %s479, 8
      %s481 = smul.addr %s480, 4
      %s482 = scalar_lea.vmem %s3, %s481
      %p483 = scmp.lt.s32.totalorder %s26, 1
      %s484 = scalar_select %p483, %s26, 1
      %s485 = smul.addr %s484, 8
      %s486 = smul.addr %s485, 4
      %s487 = scalar_lea.vmem %s4, %s486
      %p488 = scmp.lt.s32.totalorder %s26, 1
      %s489 = scalar_select %p488, %s26, 1
      %s490 = smul.addr %s489, 8
      %s491 = smul.addr %s490, 4
      %s492 = scalar_lea.vmem %s5, %s491
      %p493 = scmp.lt.s32.totalorder %s26, 1
      %s494 = scalar_select %p493, %s26, 1
      %s495 = smul.addr %s494, 16
      %s496 = smul.addr %s495, 4
      %s497 = scalar_lea.vmem %s6, %s496
      %p498 = scmp.lt.s32.totalorder %s26, 1
      %s499 = scalar_select %p498, %s26, 1
      %s500 = smul.addr %s499, 32
      %s501 = smul.addr %s500, 4
      %s502 = scalar_lea.vmem %s7, %s501
      %p503 = scmp.lt.s32.totalorder %s25, 1
      %s504 = scalar_select %p503, %s25, 1
      %s505 = smul.addr %s504, 8
      %s506 = scalar_lea.vmem %s10, %s505
      %p508 = scmp.eq.s32.totalorder %s26, 0
      // Predicated region
      $region61: #{vit_forward.3} parent=59 // pred_check
        %p509 = pneg %p508
      $region62: #{vit_forward.3} parent=59 // pred_check_branch
        %511 = sbr.rel (%p509) target = $region64
      $region63: #{vit_forward.3} parent=59 // pred_region
        %v512 = vld [vmem:[%s467] sm:$0xff]
        %vm513 = vcmask 523264
        %514 = vst.msk [vmem:[#allocation2] sm:$0xff] %vm513, %v512
      $region64: #{vit_forward.3} parent=59 // pred_fallthru
        _
      %v515 = vld [vmem:[#allocation2] sm:$0xff]
      %v516 = vld [vmem:[%s472] sm:$0xff]
      %v517 = vld [vmem:[%s472 + $0x10] sm:$0xff]
      %v518 = vld [vmem:[%s472 + $0x18] sm:$0xff]
      %vm519 = vcmask 523264
      %v520 = vsel %vm519, %v515, 0.0
      %521 = vadd.xlane.f32.xlu0 %v520
      %v522 = vpop.xlane.xlu0 %521
      %v523 = vrcp.pop 64.0
      %v524 = vmul.f32 64.0, %v523
      %v525 = vsub.f32 1.0, %v524
      %v526 = vmul.f32 %v523, %v525
      %v527 = vadd.f32 %v523, %v526
      %vm528 = vweird.f32 %v523
      %v529 = vsel %vm528, %v523, %v527
      %v530 = vmul.f32 %v522, %v529
      %v531 = vsub.f32 %v515, %v530
      %v532 = vmul.f32 %v531, %v531
      %v533 = vsel %vm519, %v532, 0.0
      %534 = vadd.xlane.f32.xlu0 %v533
      %v535 = vpop.xlane.xlu0 %534
      %v536 = vmul.f32 %v535, %v529
      %v537 = vadd.f32 %v536, 1e-06
      %v538 = vrsqrt.pop %v537
      %v539 = vmul.f32 %v538, %v537
      %v540 = vmul.f32 %v539, %v538
      %v541 = vmul.f32 0.5, %v540
      %v542 = vsub.f32 1.5, %v541
      %v543 = vmul.f32 %v538, %v542
      %vm544 = vweird.f32 %v537
      %vm545 = vweird.f32 %v538
      %vm546 = vmor %vm544, %vm545
      %v547 = vsel %vm546, %v538, %v543
      %v548 = vmul.f32 %v531, %v547
      %v549 = vperm.slane %v516, 0
      %v550 = vmul.f32 %v548, %v549
      %v551 = vperm.slane %v516, 1
      %v552 = vadd.f32 %v550, %v551
      %v553 = vpack.c.bf16 %v552, %v552
      %v554 = vld [vmem:[%s477] sm:$0xf]
      %v555 = vld [vmem:[%s477 + $0x4] sm:$0xf]
      %v556 = vld [vmem:[%s477 + $0x8] sm:$0xf]
      %v557 = vld [vmem:[%s477 + $0xc] sm:$0xf]
      %v558 = vld [vmem:[%s477 + $0x10] sm:$0xf]
      %v559 = vld [vmem:[%s477 + $0x14] sm:$0xf]
      %v560 = vld [vmem:[%s477 + $0x18] sm:$0xf]
      %v561 = vld [vmem:[%s477 + $0x1c] sm:$0xf]
      %v562 = vperm.slane %v516, 2
      %v571 = vunpack.c.l.b16 %v554
      %v572 = vunpack.c.l.b16 %v555
      %v573 = vunpack.c.l.b16 %v556
      %v574 = vunpack.c.l.b16 %v557
      %v575 = vunpack.c.l.b16 %v558
      %v576 = vunpack.c.l.b16 %v559
      %v577 = vunpack.c.l.b16 %v560
      %v578 = vunpack.c.l.b16 %v561
      %v579 = vpack.c.b16 %v572, %v571
      %v580 = vpack.c.b16 %v574, %v573
      %v581 = vpack.c.b16 %v576, %v575
      %v582 = vpack.c.b16 %v578, %v577
      %v588 = vsel %vm519, %v553, 0
      %590 = vmatpush.bf16.msra.mxu0 0
      %591 = vmatpush.bf16.msra.mxu0 0
      %592 = vmatpush.bf16.msra.mxu0 0
      %593 = vmatpush.bf16.msra.mxu0 0
      %594 = vmatpush.bf16.msra.mxu0 %v582
      %595 = vmatpush.bf16.msra.mxu0 %v581
      %596 = vmatpush.bf16.msra.mxu0 %v580
      %597 = vmatpush.bf16.msra.mxu0 %v579
      %598 = vmatmul.bf16.gmra.mxu0 %v588
      %v599 = vpop.f32.mrf.mxu0
      %v600 = vadd.f32 %v562, %v599
      %v601 = vpop.f32.mrf.mxu0
      %602 = vdwg.mxu0
      %v603 = vmul.f32 %v600, 0.25
      %v604 = vld [vmem:[%s482] sm:$0xf]
      %v605 = vld [vmem:[%s482 + $0x4] sm:$0xf]
      %v606 = vld [vmem:[%s482 + $0x8] sm:$0xf]
      %v607 = vld [vmem:[%s482 + $0xc] sm:$0xf]
      %v608 = vld [vmem:[%s482 + $0x10] sm:$0xf]
      %v609 = vld [vmem:[%s482 + $0x14] sm:$0xf]
      %v610 = vld [vmem:[%s482 + $0x18] sm:$0xf]
      %v611 = vld [vmem:[%s482 + $0x1c] sm:$0xf]
      %v612 = vperm.slane %v516, 3
      %v621 = vunpack.c.l.b16 %v604
      %v622 = vunpack.c.l.b16 %v605
      %v623 = vunpack.c.l.b16 %v606
      %v624 = vunpack.c.l.b16 %v607
      %v625 = vunpack.c.l.b16 %v608
      %v626 = vunpack.c.l.b16 %v609
      %v627 = vunpack.c.l.b16 %v610
      %v628 = vunpack.c.l.b16 %v611
      %v629 = vpack.c.b16 %v622, %v621
      %v630 = vpack.c.b16 %v624, %v623
      %v631 = vpack.c.b16 %v626, %v625
      %v632 = vpack.c.b16 %v628, %v627
      %637 = vmatpush.bf16.msra.mxu0 0
      %638 = vmatpush.bf16.msra.mxu0 0
      %639 = vmatpush.bf16.msra.mxu0 0
      %640 = vmatpush.bf16.msra.mxu0 0
      %641 = vmatpush.bf16.msra.mxu0 %v632
      %642 = vmatpush.bf16.msra.mxu0 %v631
      %643 = vmatpush.bf16.msra.mxu0 %v630
      %644 = vmatpush.bf16.msra.mxu0 %v629
      %645 = vmatmul.bf16.gmra.mxu0 %v588
      %v646 = vpop.f32.mrf.mxu0
      %v647 = vadd.f32 %v612, %v646
      %v648 = vpop.f32.mrf.mxu0
      %649 = vdwg.mxu0
      %v650 = vld [vmem:[%s487] sm:$0xf]
      %v651 = vld [vmem:[%s487 + $0x4] sm:$0xf]
      %v652 = vld [vmem:[%s487 + $0x8] sm:$0xf]
      %v653 = vld [vmem:[%s487 + $0xc] sm:$0xf]
      %v654 = vld [vmem:[%s487 + $0x10] sm:$0xf]
      %v655 = vld [vmem:[%s487 + $0x14] sm:$0xf]
      %v656 = vld [vmem:[%s487 + $0x18] sm:$0xf]
      %v657 = vld [vmem:[%s487 + $0x1c] sm:$0xf]
      %v658 = vperm.slane %v516, 4
      %v667 = vunpack.c.l.b16 %v650
      %v668 = vunpack.c.l.b16 %v651
      %v669 = vunpack.c.l.b16 %v652
      %v670 = vunpack.c.l.b16 %v653
      %v671 = vunpack.c.l.b16 %v654
      %v672 = vunpack.c.l.b16 %v655
      %v673 = vunpack.c.l.b16 %v656
      %v674 = vunpack.c.l.b16 %v657
      %v675 = vpack.c.b16 %v668, %v667
      %v676 = vpack.c.b16 %v670, %v669
      %v677 = vpack.c.b16 %v672, %v671
      %v678 = vpack.c.b16 %v674, %v673
      %683 = vmatpush.bf16.msra.mxu0 0
      %684 = vmatpush.bf16.msra.mxu0 0
      %685 = vmatpush.bf16.msra.mxu0 0
      %686 = vmatpush.bf16.msra.mxu0 0
      %687 = vmatpush.bf16.msra.mxu0 %v678
      %688 = vmatpush.bf16.msra.mxu0 %v677
      %689 = vmatpush.bf16.msra.mxu0 %v676
      %690 = vmatpush.bf16.msra.mxu0 %v675
      %691 = vmatmul.bf16.gmra.mxu0 %v588
      %v692 = vpop.f32.mrf.mxu0
      %v693 = vadd.f32 %v658, %v692
      %v694 = vpop.f32.mrf.mxu0
      %695 = vdwg.mxu0
      %v696 = vlaneseq
      %v697 = vand.u32 %v696, 127
      %vm698 = vcmp.lt.s32.totalorder %v697, 5
      %v699 = vsel %vm698, 0.0, -1e+30
      %v700 = vpack.c.bf16 %v603, %v603
      %v701 = vpack.c.bf16 %v647, %v647
      %v702 = vpack.c.bf16 %v693, %v693
      %vm703 = vcmask 130048
      %v705 = vsel %vm703, %v700, 0
      %v708 = vsel %vm703, %v701, 0
      %710 = vmatpush.bf16.xpose.msra.mxu0 0
      %711 = vmatpush.bf16.xpose.msra.mxu0 0
      %712 = vmatpush.bf16.xpose.msra.mxu0 0
      %713 = vmatpush.bf16.xpose.msra.mxu0 0
      %714 = vmatpush.bf16.xpose.msra.mxu0 0
      %715 = vmatpush.bf16.xpose.msra.mxu0 0
      %716 = vmatpush.bf16.xpose.msra.mxu0 0
      %717 = vmatpush.bf16.xpose.msra.mxu0 %v708
      %718 = vmatmul.bf16.gmra.mxu0 %v705
      %v719 = vpop.f32.mrf.mxu0
      %v720 = vadd.f32 %v699, %v719
      %v721 = vpop.f32.mrf.mxu0
      %722 = vdwg.mxu0
      %vm723 = vcmask 64512
      %v724 = vsel %vm723, %v720, -inf
      %725 = vmax.xlane.f32.xlu0 %v724
      %v726 = vpop.xlane.xlu0 %725
      %v727 = vsub.f32 %v720, %v726
      %v728 = vmul.f32 %v727, 1.442695
      %v729 = vpow.pop %v728
      %v730 = vsel %vm723, %v729, 0.0
      %731 = vadd.xlane.f32.xlu0 %v730
      %v732 = vpop.xlane.xlu0 %731
      %v733 = vrcp.pop %v732
      %v734 = vmul.f32 %v732, %v733
      %v735 = vsub.f32 1.0, %v734
      %v736 = vmul.f32 %v733, %v735
      %v737 = vadd.f32 %v733, %v736
      %vm738 = vweird.f32 %v732
      %vm739 = vweird.f32 %v733
      %vm740 = vmor %vm738, %vm739
      %v741 = vsel %vm740, %v733, %v737
      %v742 = vand.u32 2147483647, %v732
      %vm743 = vcmp.eq.f32.partialorder %v742, 8.507059e+37
      %v744 = vand.u32 %v732, 2147483648
      %v745 = vor.u32 1.1754944e-38, %v744
      %v746 = vsel %vm743, %v745, %v741
      %v747 = vmul.f32 %v729, %v746
      %v748 = vpack.c.bf16 %v747, %v747
      %v750 = vsel %vm723, %v748, 0
      %vm752 = vcmask 1043456
      %v754 = vsel %vm752, %v702, 0
      %756 = vmatpush.bf16.msra.mxu0 0
      %757 = vmatpush.bf16.msra.mxu0 0
      %758 = vmatpush.bf16.msra.mxu0 0
      %759 = vmatpush.bf16.msra.mxu0 0
      %760 = vmatpush.bf16.msra.mxu0 0
      %761 = vmatpush.bf16.msra.mxu0 0
      %762 = vmatpush.bf16.msra.mxu0 0
      %763 = vmatpush.bf16.msra.mxu0 %v754
      %764 = vmatmul.bf16.gmra.mxu0 %v750
      %v765 = vpop.f32.mrf.mxu0
      %v766 = vadd.f32 0.0, %v765
      %v767 = vpop.f32.mrf.mxu0
      %768 = vdwg.mxu0
      %770 = vrot.lane.b32.xlu0 %v700, 112
      %v771 = vpop.permute.xlu0 %770
      %773 = vrot.lane.b32.xlu0 %v701, 112
      %v774 = vpop.permute.xlu0 %773
      %v776 = vsel %vm703, %v771, 0
      %v779 = vsel %vm703, %v774, 0
      %781 = vmatpush.bf16.xpose.msra.mxu0 0
      %782 = vmatpush.bf16.xpose.msra.mxu0 0
      %783 = vmatpush.bf16.xpose.msra.mxu0 0
      %784 = vmatpush.bf16.xpose.msra.mxu0 0
      %785 = vmatpush.bf16.xpose.msra.mxu0 0
      %786 = vmatpush.bf16.xpose.msra.mxu0 0
      %787 = vmatpush.bf16.xpose.msra.mxu0 0
      %788 = vmatpush.bf16.xpose.msra.mxu0 %v779
      %789 = vmatmul.bf16.gmra.mxu0 %v776
      %v790 = vpop.f32.mrf.mxu0
      %v791 = vadd.f32 %v699, %v790
      %v792 = vpop.f32.mrf.mxu0
      %793 = vdwg.mxu0
      %v794 = vsel %vm723, %v791, -inf
      %795 = vmax.xlane.f32.xlu0 %v794
      %v796 = vpop.xlane.xlu0 %795
      %v797 = vsub.f32 %v791, %v796
      %v798 = vmul.f32 %v797, 1.442695
      %v799 = vpow.pop %v798
      %v800 = vsel %vm723, %v799, 0.0
      %801 = vadd.xlane.f32.xlu0 %v800
      %v802 = vpop.xlane.xlu0 %801
      %v803 = vrcp.pop %v802
      %v804 = vmul.f32 %v802, %v803
      %v805 = vsub.f32 1.0, %v804
      %v806 = vmul.f32 %v803, %v805
      %v807 = vadd.f32 %v803, %v806
      %vm808 = vweird.f32 %v802
      %vm809 = vweird.f32 %v803
      %vm810 = vmor %vm808, %vm809
      %v811 = vsel %vm810, %v803, %v807
      %v812 = vand.u32 2147483647, %v802
      %vm813 = vcmp.eq.f32.partialorder %v812, 8.507059e+37
      %v814 = vand.u32 %v802, 2147483648
      %v815 = vor.u32 1.1754944e-38, %v814
      %v816 = vsel %vm813, %v815, %v811
      %v817 = vmul.f32 %v799, %v816
      %v818 = vpack.c.bf16 %v817, %v817
      %820 = vrot.lane.b32.xlu0 %v702, 112
      %v821 = vpop.permute.xlu0 %820
      %v823 = vsel %vm723, %v818, 0
      %v826 = vsel %vm752, %v821, 0
      %828 = vmatpush.bf16.msra.mxu0 0
      %829 = vmatpush.bf16.msra.mxu0 0
      %830 = vmatpush.bf16.msra.mxu0 0
      %831 = vmatpush.bf16.msra.mxu0 0
      %832 = vmatpush.bf16.msra.mxu0 0
      %833 = vmatpush.bf16.msra.mxu0 0
      %834 = vmatpush.bf16.msra.mxu0 0
      %835 = vmatpush.bf16.msra.mxu0 %v826
      %836 = vmatmul.bf16.gmra.mxu0 %v823
      %v837 = vpop.f32.mrf.mxu0
      %v838 = vadd.f32 0.0, %v837
      %v839 = vpop.f32.mrf.mxu0
      %840 = vdwg.mxu0
      %841 = vrot.lane.b32.xlu0 %v700, 96
      %v842 = vpop.permute.xlu0 %841
      %843 = vrot.lane.b32.xlu0 %v701, 96
      %v844 = vpop.permute.xlu0 %843
      %v846 = vsel %vm703, %v842, 0
      %v849 = vsel %vm703, %v844, 0
      %851 = vmatpush.bf16.xpose.msra.mxu0 0
      %852 = vmatpush.bf16.xpose.msra.mxu0 0
      %853 = vmatpush.bf16.xpose.msra.mxu0 0
      %854 = vmatpush.bf16.xpose.msra.mxu0 0
      %855 = vmatpush.bf16.xpose.msra.mxu0 0
      %856 = vmatpush.bf16.xpose.msra.mxu0 0
      %857 = vmatpush.bf16.xpose.msra.mxu0 0
      %858 = vmatpush.bf16.xpose.msra.mxu0 %v849
      %859 = vmatmul.bf16.gmra.mxu0 %v846
      %v860 = vpop.f32.mrf.mxu0
      %v861 = vadd.f32 %v699, %v860
      %v862 = vpop.f32.mrf.mxu0
      %863 = vdwg.mxu0
      %v864 = vsel %vm723, %v861, -inf
      %865 = vmax.xlane.f32.xlu0 %v864
      %v866 = vpop.xlane.xlu0 %865
      %v867 = vsub.f32 %v861, %v866
      %v868 = vmul.f32 %v867, 1.442695
      %v869 = vpow.pop %v868
      %v870 = vsel %vm723, %v869, 0.0
      %871 = vadd.xlane.f32.xlu0 %v870
      %v872 = vpop.xlane.xlu0 %871
      %v873 = vrcp.pop %v872
      %v874 = vmul.f32 %v872, %v873
      %v875 = vsub.f32 1.0, %v874
      %v876 = vmul.f32 %v873, %v875
      %v877 = vadd.f32 %v873, %v876
      %vm878 = vweird.f32 %v872
      %vm879 = vweird.f32 %v873
      %vm880 = vmor %vm878, %vm879
      %v881 = vsel %vm880, %v873, %v877
      %v882 = vand.u32 2147483647, %v872
      %vm883 = vcmp.eq.f32.partialorder %v882, 8.507059e+37
      %v884 = vand.u32 %v872, 2147483648
      %v885 = vor.u32 1.1754944e-38, %v884
      %v886 = vsel %vm883, %v885, %v881
      %v887 = vmul.f32 %v869, %v886
      %v888 = vpack.c.bf16 %v887, %v887
      %889 = vrot.lane.b32.xlu0 %v702, 96
      %v890 = vpop.permute.xlu0 %889
      %v892 = vsel %vm723, %v888, 0
      %v895 = vsel %vm752, %v890, 0
      %897 = vmatpush.bf16.msra.mxu0 0
      %898 = vmatpush.bf16.msra.mxu0 0
      %899 = vmatpush.bf16.msra.mxu0 0
      %900 = vmatpush.bf16.msra.mxu0 0
      %901 = vmatpush.bf16.msra.mxu0 0
      %902 = vmatpush.bf16.msra.mxu0 0
      %903 = vmatpush.bf16.msra.mxu0 0
      %904 = vmatpush.bf16.msra.mxu0 %v895
      %905 = vmatmul.bf16.gmra.mxu0 %v892
      %v906 = vpop.f32.mrf.mxu0
      %v907 = vadd.f32 0.0, %v906
      %v908 = vpop.f32.mrf.mxu0
      %909 = vdwg.mxu0
      %910 = vrot.lane.b32.xlu0 %v700, 80
      %v911 = vpop.permute.xlu0 %910
      %912 = vrot.lane.b32.xlu0 %v701, 80
      %v913 = vpop.permute.xlu0 %912
      %v915 = vsel %vm703, %v911, 0
      %v918 = vsel %vm703, %v913, 0
      %920 = vmatpush.bf16.xpose.msra.mxu0 0
      %921 = vmatpush.bf16.xpose.msra.mxu0 0
      %922 = vmatpush.bf16.xpose.msra.mxu0 0
      %923 = vmatpush.bf16.xpose.msra.mxu0 0
      %924 = vmatpush.bf16.xpose.msra.mxu0 0
      %925 = vmatpush.bf16.xpose.msra.mxu0 0
      %926 = vmatpush.bf16.xpose.msra.mxu0 0
      %927 = vmatpush.bf16.xpose.msra.mxu0 %v918
      %928 = vmatmul.bf16.gmra.mxu0 %v915
      %v929 = vpop.f32.mrf.mxu0
      %v930 = vadd.f32 %v699, %v929
      %v931 = vpop.f32.mrf.mxu0
      %932 = vdwg.mxu0
      %v933 = vsel %vm723, %v930, -inf
      %934 = vmax.xlane.f32.xlu0 %v933
      %v935 = vpop.xlane.xlu0 %934
      %v936 = vsub.f32 %v930, %v935
      %v937 = vmul.f32 %v936, 1.442695
      %v938 = vpow.pop %v937
      %v939 = vsel %vm723, %v938, 0.0
      %940 = vadd.xlane.f32.xlu0 %v939
      %v941 = vpop.xlane.xlu0 %940
      %v942 = vrcp.pop %v941
      %v943 = vmul.f32 %v941, %v942
      %v944 = vsub.f32 1.0, %v943
      %v945 = vmul.f32 %v942, %v944
      %v946 = vadd.f32 %v942, %v945
      %vm947 = vweird.f32 %v941
      %vm948 = vweird.f32 %v942
      %vm949 = vmor %vm947, %vm948
      %v950 = vsel %vm949, %v942, %v946
      %v951 = vand.u32 2147483647, %v941
      %vm952 = vcmp.eq.f32.partialorder %v951, 8.507059e+37
      %v953 = vand.u32 %v941, 2147483648
      %v954 = vor.u32 1.1754944e-38, %v953
      %v955 = vsel %vm952, %v954, %v950
      %v956 = vmul.f32 %v938, %v955
      %v957 = vpack.c.bf16 %v956, %v956
      %958 = vrot.lane.b32.xlu0 %v702, 80
      %v959 = vpop.permute.xlu0 %958
      %v961 = vsel %vm723, %v957, 0
      %v964 = vsel %vm752, %v959, 0
      %966 = vmatpush.bf16.msra.mxu0 0
      %967 = vmatpush.bf16.msra.mxu0 0
      %968 = vmatpush.bf16.msra.mxu0 0
      %969 = vmatpush.bf16.msra.mxu0 0
      %970 = vmatpush.bf16.msra.mxu0 0
      %971 = vmatpush.bf16.msra.mxu0 0
      %972 = vmatpush.bf16.msra.mxu0 0
      %973 = vmatpush.bf16.msra.mxu0 %v964
      %974 = vmatmul.bf16.gmra.mxu0 %v961
      %v975 = vpop.f32.mrf.mxu0
      %v976 = vadd.f32 0.0, %v975
      %v977 = vpop.f32.mrf.mxu0
      %978 = vdwg.mxu0
      %980 = vrot.lane.b32.xlu0 %v838, 16
      %v981 = vpop.permute.xlu0 %980
      %984 = vrot.lane.b32.xlu0 %v907, 32
      %v985 = vpop.permute.xlu0 %984
      %988 = vrot.lane.b32.xlu0 %v976, 48
      %v989 = vpop.permute.xlu0 %988
      %v991 = vsel %vm703, %v766, %v981
      %vm992 = vcmask 261120
      %v993 = vsel %vm992, %v991, %v985
      %vm994 = vcmask 392192
      %v995 = vsel %vm994, %v993, %v989
      %v996 = vpack.c.bf16 %v995, %v995
      %v997 = vld [vmem:[%s492] sm:$0xf]
      %v998 = vld [vmem:[%s492 + $0x4] sm:$0xf]
      %v999 = vld [vmem:[%s492 + $0x8] sm:$0xf]
      %v1000 = vld [vmem:[%s492 + $0xc] sm:$0xf]
      %v1001 = vld [vmem:[%s492 + $0x10] sm:$0xf]
      %v1002 = vld [vmem:[%s492 + $0x14] sm:$0xf]
      %v1003 = vld [vmem:[%s492 + $0x18] sm:$0xf]
      %v1004 = vld [vmem:[%s492 + $0x1c] sm:$0xf]
      %v1005 = vperm.slane %v516, 5
      %v1014 = vunpack.c.l.b16 %v997
      %v1015 = vunpack.c.l.b16 %v998
      %v1016 = vunpack.c.l.b16 %v999
      %v1017 = vunpack.c.l.b16 %v1000
      %v1018 = vunpack.c.l.b16 %v1001
      %v1019 = vunpack.c.l.b16 %v1002
      %v1020 = vunpack.c.l.b16 %v1003
      %v1021 = vunpack.c.l.b16 %v1004
      %v1022 = vpack.c.b16 %v1015, %v1014
      %v1023 = vpack.c.b16 %v1017, %v1016
      %v1024 = vpack.c.b16 %v1019, %v1018
      %v1025 = vpack.c.b16 %v1021, %v1020
      %v1031 = vsel %vm519, %v996, 0
      %1033 = vmatpush.bf16.msra.mxu0 0
      %1034 = vmatpush.bf16.msra.mxu0 0
      %1035 = vmatpush.bf16.msra.mxu0 0
      %1036 = vmatpush.bf16.msra.mxu0 0
      %1037 = vmatpush.bf16.msra.mxu0 %v1025
      %1038 = vmatpush.bf16.msra.mxu0 %v1024
      %1039 = vmatpush.bf16.msra.mxu0 %v1023
      %1040 = vmatpush.bf16.msra.mxu0 %v1022
      %1041 = vmatmul.bf16.gmra.mxu0 %v1031
      %v1042 = vpop.f32.mrf.mxu0
      %v1043 = vadd.f32 %v1005, %v1042
      %v1044 = vpop.f32.mrf.mxu0
      %1045 = vdwg.mxu0
      %v1046 = vperm.slane %v516, 6
      %v1047 = vmul.f32 %v1046, %v1043
      %v1048 = vadd.f32 %v515, %v1047
      %v1049 = vsel %vm519, %v1048, 0.0
      %1050 = vadd.xlane.f32.xlu0 %v1049
      %v1051 = vpop.xlane.xlu0 %1050
      %v1052 = vmul.f32 %v1051, %v529
      %v1053 = vsub.f32 %v1048, %v1052
      %v1054 = vmul.f32 %v1053, %v1053
      %v1055 = vsel %vm519, %v1054, 0.0
      %1056 = vadd.xlane.f32.xlu0 %v1055
      %v1057 = vpop.xlane.xlu0 %1056
      %v1058 = vmul.f32 %v1057, %v529
      %v1059 = vadd.f32 %v1058, 1e-06
      %v1060 = vrsqrt.pop %v1059
      %v1061 = vmul.f32 %v1060, %v1059
      %v1062 = vmul.f32 %v1061, %v1060
      %v1063 = vmul.f32 0.5, %v1062
      %v1064 = vsub.f32 1.5, %v1063
      %v1065 = vmul.f32 %v1060, %v1064
      %vm1066 = vweird.f32 %v1059
      %vm1067 = vweird.f32 %v1060
      %vm1068 = vmor %vm1066, %vm1067
      %v1069 = vsel %vm1068, %v1060, %v1065
      %v1070 = vmul.f32 %v1053, %v1069
      %v1071 = vperm.slane %v516, 7
      %v1072 = vmul.f32 %v1070, %v1071
      %v1073 = vperm.slane %v517, 0
      %v1074 = vadd.f32 %v1072, %v1073
      %v1075 = vpack.c.bf16 %v1074, %v1074
      %v1076 = vld [vmem:[%s497] sm:$0xff]
      %v1077 = vld [vmem:[%s497 + $0x8] sm:$0xff]
      %v1078 = vld [vmem:[%s497 + $0x10] sm:$0xff]
      %v1079 = vld [vmem:[%s497 + $0x18] sm:$0xff]
      %v1080 = vld [vmem:[%s497 + $0x20] sm:$0xff]
      %v1081 = vld [vmem:[%s497 + $0x28] sm:$0xff]
      %v1082 = vld [vmem:[%s497 + $0x30] sm:$0xff]
      %v1083 = vld [vmem:[%s497 + $0x38] sm:$0xff]
      %v1084 = vperm.slane %v517, 1
      %v1085 = vperm.slane %v518, 1
      %v1094 = vunpack.c.l.b16 %v1076
      %v1095 = vunpack.c.h.b16 %v1076
      %v1096 = vunpack.c.l.b16 %v1077
      %v1097 = vunpack.c.h.b16 %v1077
      %v1098 = vunpack.c.l.b16 %v1078
      %v1099 = vunpack.c.h.b16 %v1078
      %v1100 = vunpack.c.l.b16 %v1079
      %v1101 = vunpack.c.h.b16 %v1079
      %v1102 = vunpack.c.l.b16 %v1080
      %v1103 = vunpack.c.h.b16 %v1080
      %v1104 = vunpack.c.l.b16 %v1081
      %v1105 = vunpack.c.h.b16 %v1081
      %v1106 = vunpack.c.l.b16 %v1082
      %v1107 = vunpack.c.h.b16 %v1082
      %v1108 = vunpack.c.l.b16 %v1083
      %v1109 = vunpack.c.h.b16 %v1083
      %v1110 = vpack.c.b16 %v1096, %v1094
      %v1111 = vpack.c.b16 %v1097, %v1095
      %v1112 = vpack.c.b16 %v1100, %v1098
      %v1113 = vpack.c.b16 %v1101, %v1099
      %v1114 = vpack.c.b16 %v1104, %v1102
      %v1115 = vpack.c.b16 %v1105, %v1103
      %v1116 = vpack.c.b16 %v1108, %v1106
      %v1117 = vpack.c.b16 %v1109, %v1107
      %v1127 = vsel %vm519, %v1075, 0
      %1129 = vmatpush.bf16.msra.mxu0 0
      %1130 = vmatpush.bf16.msra.mxu0 0
      %1131 = vmatpush.bf16.msra.mxu0 0
      %1132 = vmatpush.bf16.msra.mxu0 0
      %1133 = vmatpush.bf16.msra.mxu0 %v1116
      %1134 = vmatpush.bf16.msra.mxu0 %v1114
      %1135 = vmatpush.bf16.msra.mxu0 %v1112
      %1136 = vmatpush.bf16.msra.mxu0 %v1110
      %1137 = vmatmul.bf16.gmra.mxu0 %v1127
      %v1138 = vpop.f32.mrf.mxu0
      %v1139 = vadd.f32 %v1084, %v1138
      %v1140 = vpop.f32.mrf.mxu0
      %1141 = vdwg.mxu0
      %1142 = vmatpush.bf16.msra.mxu0 0
      %1143 = vmatpush.bf16.msra.mxu0 0
      %1144 = vmatpush.bf16.msra.mxu0 0
      %1145 = vmatpush.bf16.msra.mxu0 0
      %1146 = vmatpush.bf16.msra.mxu0 %v1117
      %1147 = vmatpush.bf16.msra.mxu0 %v1115
      %1148 = vmatpush.bf16.msra.mxu0 %v1113
      %1149 = vmatpush.bf16.msra.mxu0 %v1111
      %1150 = vmatmul.bf16.gmra.mxu0 %v1127
      %v1151 = vpop.f32.mrf.mxu0
      %v1152 = vadd.f32 %v1085, %v1151
      %v1153 = vpop.f32.mrf.mxu0
      %1154 = vdwg.mxu0
      %v1155 = vmul.f32 %v1139, 0.5
      %v1156 = vmul.f32 %v1152, 0.5
      %v1157 = vmul.f32 %v1139, 0.70710677
      %v1158 = vmul.f32 %v1152, 0.70710677
      %v1159 = vand.u32 2147483647, %v1157
      %v1160 = vand.u32 2147483647, %v1158
      %v1161 = vmul.f32 %v1159, 0.3275911
      %v1162 = vmul.f32 %v1160, 0.3275911
      %v1163 = vadd.f32 %v1161, 1.0
      %v1164 = vadd.f32 %v1162, 1.0
      %v1165 = vrcp.pop %v1163
      %v1166 = vmul.f32 %v1163, %v1165
      %v1167 = vsub.f32 1.0, %v1166
      %v1168 = vmul.f32 %v1165, %v1167
      %v1169 = vadd.f32 %v1165, %v1168
      %vm1170 = vweird.f32 %v1163
      %vm1171 = vweird.f32 %v1165
      %vm1172 = vmor %vm1170, %vm1171
      %v1173 = vsel %vm1172, %v1165, %v1169
      %v1174 = vand.u32 2147483647, %v1163
      %vm1175 = vcmp.eq.f32.partialorder %v1174, 8.507059e+37
      %v1176 = vand.u32 %v1163, 2147483648
      %v1177 = vor.u32 1.1754944e-38, %v1176
      %v1178 = vsel %vm1175, %v1177, %v1173
      %v1179 = vmul.f32 1.0, %v1178
      %v1180 = vrcp.pop %v1164
      %v1181 = vmul.f32 %v1164, %v1180
      %v1182 = vsub.f32 1.0, %v1181
      %v1183 = vmul.f32 %v1180, %v1182
      %v1184 = vadd.f32 %v1180, %v1183
      %vm1185 = vweird.f32 %v1164
      %vm1186 = vweird.f32 %v1180
      %vm1187 = vmor %vm1185, %vm1186
      %v1188 = vsel %vm1187, %v1180, %v1184
      %v1189 = vand.u32 2147483647, %v1164
      %vm1190 = vcmp.eq.f32.partialorder %v1189, 8.507059e+37
      %v1191 = vand.u32 %v1164, 2147483648
      %v1192 = vor.u32 1.1754944e-38, %v1191
      %v1193 = vsel %vm1190, %v1192, %v1188
      %v1194 = vmul.f32 1.0, %v1193
      %v1195 = vmul.f32 %v1179, 1.0614054
      %v1196 = vmul.f32 %v1194, 1.0614054
      %v1197 = vadd.f32 %v1195, -1.4531521
      %v1198 = vadd.f32 %v1196, -1.4531521
      %v1199 = vmul.f32 %v1197, %v1179
      %v1200 = vmul.f32 %v1198, %v1194
      %v1201 = vadd.f32 %v1199, 1.4214138
      %v1202 = vadd.f32 %v1200, 1.4214138
      %v1203 = vmul.f32 %v1201, %v1179
      %v1204 = vmul.f32 %v1202, %v1194
      %v1205 = vadd.f32 %v1203, -0.28449672
      %v1206 = vadd.f32 %v1204, -0.28449672
      %v1207 = vmul.f32 %v1205, %v1179
      %v1208 = vmul.f32 %v1206, %v1194
      %v1209 = vadd.f32 %v1207, 0.2548296
      %v1210 = vadd.f32 %v1208, 0.2548296
      %v1211 = vmul.f32 %v1209, %v1179
      %v1212 = vmul.f32 %v1210, %v1194
      %v1213 = vsub.f32 0.0, %v1159
      %v1214 = vsub.f32 0.0, %v1160
      %v1215 = vmul.f32 %v1213, %v1159
      %v1216 = vmul.f32 %v1214, %v1160
      %v1217 = vmul.f32 %v1215, 1.442695
      %v1218 = vpow.pop %v1217
      %v1219 = vmul.f32 %v1216, 1.442695
      %v1220 = vpow.pop %v1219
      %v1221 = vmul.f32 %v1211, %v1218
      %v1222 = vmul.f32 %v1212, %v1220
      %v1223 = vsub.f32 1.0, %v1221
      %v1224 = vsub.f32 1.0, %v1222
      %vm1225 = vcmp.ge.f32.partialorder %v1157, 0.0
      %vm1226 = vcmp.ge.f32.partialorder %v1158, 0.0
      %v1227 = vsub.f32 0.0, %v1223
      %v1228 = vsub.f32 0.0, %v1224
      %v1229 = vsel %vm1225, %v1223, %v1227
      %v1230 = vsel %vm1226, %v1224, %v1228
      %v1231 = vadd.f32 %v1229, 1.0
      %v1232 = vadd.f32 %v1230, 1.0
      %v1233 = vmul.f32 %v1155, %v1231
      %v1234 = vmul.f32 %v1156, %v1232
      %v1235 = vpack.c.bf16 %v1233, %v1233
      %v1236 = vpack.c.bf16 %v1234, %v1234
      %v1237 = vld [vmem:[%s502] sm:$0xf]
      %v1238 = vld [vmem:[%s502 + $0x4] sm:$0xf]
      %v1239 = vld [vmem:[%s502 + $0x8] sm:$0xf]
      %v1240 = vld [vmem:[%s502 + $0xc] sm:$0xf]
      %v1241 = vld [vmem:[%s502 + $0x10] sm:$0xf]
      %v1242 = vld [vmem:[%s502 + $0x14] sm:$0xf]
      %v1243 = vld [vmem:[%s502 + $0x18] sm:$0xf]
      %v1244 = vld [vmem:[%s502 + $0x1c] sm:$0xf]
      %v1245 = vld [vmem:[%s502 + $0x20] sm:$0xf]
      %v1246 = vld [vmem:[%s502 + $0x24] sm:$0xf]
      %v1247 = vld [vmem:[%s502 + $0x28] sm:$0xf]
      %v1248 = vld [vmem:[%s502 + $0x2c] sm:$0xf]
      %v1249 = vld [vmem:[%s502 + $0x30] sm:$0xf]
      %v1250 = vld [vmem:[%s502 + $0x34] sm:$0xf]
      %v1251 = vld [vmem:[%s502 + $0x38] sm:$0xf]
      %v1252 = vld [vmem:[%s502 + $0x3c] sm:$0xf]
      %v1253 = vld [vmem:[%s502 + $0x40] sm:$0xf]
      %v1254 = vld [vmem:[%s502 + $0x44] sm:$0xf]
      %v1255 = vld [vmem:[%s502 + $0x48] sm:$0xf]
      %v1256 = vld [vmem:[%s502 + $0x4c] sm:$0xf]
      %v1257 = vld [vmem:[%s502 + $0x50] sm:$0xf]
      %v1258 = vld [vmem:[%s502 + $0x54] sm:$0xf]
      %v1259 = vld [vmem:[%s502 + $0x58] sm:$0xf]
      %v1260 = vld [vmem:[%s502 + $0x5c] sm:$0xf]
      %v1261 = vld [vmem:[%s502 + $0x60] sm:$0xf]
      %v1262 = vld [vmem:[%s502 + $0x64] sm:$0xf]
      %v1263 = vld [vmem:[%s502 + $0x68] sm:$0xf]
      %v1264 = vld [vmem:[%s502 + $0x6c] sm:$0xf]
      %v1265 = vld [vmem:[%s502 + $0x70] sm:$0xf]
      %v1266 = vld [vmem:[%s502 + $0x74] sm:$0xf]
      %v1267 = vld [vmem:[%s502 + $0x78] sm:$0xf]
      %v1268 = vld [vmem:[%s502 + $0x7c] sm:$0xf]
      %v1269 = vperm.slane %v517, 2
      %v1302 = vunpack.c.l.b16 %v1237
      %v1303 = vunpack.c.l.b16 %v1238
      %v1304 = vunpack.c.l.b16 %v1239
      %v1305 = vunpack.c.l.b16 %v1240
      %v1306 = vunpack.c.l.b16 %v1241
      %v1307 = vunpack.c.l.b16 %v1242
      %v1308 = vunpack.c.l.b16 %v1243
      %v1309 = vunpack.c.l.b16 %v1244
      %v1310 = vunpack.c.l.b16 %v1245
      %v1311 = vunpack.c.l.b16 %v1246
      %v1312 = vunpack.c.l.b16 %v1247
      %v1313 = vunpack.c.l.b16 %v1248
      %v1314 = vunpack.c.l.b16 %v1249
      %v1315 = vunpack.c.l.b16 %v1250
      %v1316 = vunpack.c.l.b16 %v1251
      %v1317 = vunpack.c.l.b16 %v1252
      %v1318 = vunpack.c.l.b16 %v1253
      %v1319 = vunpack.c.l.b16 %v1254
      %v1320 = vunpack.c.l.b16 %v1255
      %v1321 = vunpack.c.l.b16 %v1256
      %v1322 = vunpack.c.l.b16 %v1257
      %v1323 = vunpack.c.l.b16 %v1258
      %v1324 = vunpack.c.l.b16 %v1259
      %v1325 = vunpack.c.l.b16 %v1260
      %v1326 = vunpack.c.l.b16 %v1261
      %v1327 = vunpack.c.l.b16 %v1262
      %v1328 = vunpack.c.l.b16 %v1263
      %v1329 = vunpack.c.l.b16 %v1264
      %v1330 = vunpack.c.l.b16 %v1265
      %v1331 = vunpack.c.l.b16 %v1266
      %v1332 = vunpack.c.l.b16 %v1267
      %v1333 = vunpack.c.l.b16 %v1268
      %v1334 = vpack.c.b16 %v1303, %v1302
      %v1335 = vpack.c.b16 %v1305, %v1304
      %v1336 = vpack.c.b16 %v1307, %v1306
      %v1337 = vpack.c.b16 %v1309, %v1308
      %v1338 = vpack.c.b16 %v1311, %v1310
      %v1339 = vpack.c.b16 %v1313, %v1312
      %v1340 = vpack.c.b16 %v1315, %v1314
      %v1341 = vpack.c.b16 %v1317, %v1316
      %v1342 = vpack.c.b16 %v1319, %v1318
      %v1343 = vpack.c.b16 %v1321, %v1320
      %v1344 = vpack.c.b16 %v1323, %v1322
      %v1345 = vpack.c.b16 %v1325, %v1324
      %v1346 = vpack.c.b16 %v1327, %v1326
      %v1347 = vpack.c.b16 %v1329, %v1328
      %v1348 = vpack.c.b16 %v1331, %v1330
      %v1349 = vpack.c.b16 %v1333, %v1332
      %1366 = vmatpush.bf16.msra.mxu0 %v1341
      %1367 = vmatpush.bf16.msra.mxu0 %v1340
      %1368 = vmatpush.bf16.msra.mxu0 %v1339
      %1369 = vmatpush.bf16.msra.mxu0 %v1338
      %1370 = vmatpush.bf16.msra.mxu0 %v1337
      %1371 = vmatpush.bf16.msra.mxu0 %v1336
      %1372 = vmatpush.bf16.msra.mxu0 %v1335
      %1373 = vmatpush.bf16.msra.mxu0 %v1334
      %1374 = vmatmul.bf16.gmra.mxu0 %v1235
      %v1375 = vpop.f32.mrf.mxu0
      %v1376 = vadd.f32 %v1269, %v1375
      %v1377 = vpop.f32.mrf.mxu0
      %1378 = vdwg.mxu0
      %1379 = vmatpush.bf16.msra.mxu0 %v1349
      %1380 = vmatpush.bf16.msra.mxu0 %v1348
      %1381 = vmatpush.bf16.msra.mxu0 %v1347
      %1382 = vmatpush.bf16.msra.mxu0 %v1346
      %1383 = vmatpush.bf16.msra.mxu0 %v1345
      %1384 = vmatpush.bf16.msra.mxu0 %v1344
      %1385 = vmatpush.bf16.msra.mxu0 %v1343
      %1386 = vmatpush.bf16.msra.mxu0 %v1342
      %1387 = vmatmul.bf16.gmra.mxu0 %v1236
      %v1388 = vpop.f32.mrf.mxu0
      %v1389 = vadd.f32 %v1376, %v1388
      %v1390 = vpop.f32.mrf.mxu0
      %1391 = vdwg.mxu0
      %v1392 = vperm.slane %v517, 3
      %v1393 = vmul.f32 %v1392, %v1389
      %v1394 = vadd.f32 %v1048, %v1393
      %1395 = vst.msk [vmem:[#allocation2] sm:$0xff] %vm519, %v1394
      %p1396 = scmp.eq.s32.totalorder %s26, 1
      // Predicated region
      $region65: #{vit_forward.3} parent=59 // pred_check
        %p1397 = pneg %p1396
      $region66: #{vit_forward.3} parent=59 // pred_check_branch
        %1399 = sbr.rel (%p1397) target = $region68
      $region67: #{vit_forward.3} parent=59 // pred_region
        %v1400 = vld [vmem:[%s8] sm:$0x1]
        %v1401 = vld [vmem:[%s9] sm:$0x1]
        %v1402 = vsel %vm519, %v1394, 0.0
        %1403 = vadd.xlane.f32.xlu0 %v1402
        %v1404 = vpop.xlane.xlu0 %1403
        %v1405 = vmul.f32 %v1404, %v529
        %v1406 = vsub.f32 %v1394, %v1405
        %v1407 = vmul.f32 %v1406, %v1406
        %v1408 = vsel %vm519, %v1407, 0.0
        %1409 = vadd.xlane.f32.xlu0 %v1408
        %v1410 = vpop.xlane.xlu0 %1409
        %v1411 = vmul.f32 %v1410, %v529
        %v1412 = vadd.f32 %v1411, 1e-06
        %v1413 = vrsqrt.pop %v1412
        %v1414 = vmul.f32 %v1413, %v1412
        %v1415 = vmul.f32 %v1414, %v1413
        %v1416 = vmul.f32 0.5, %v1415
        %v1417 = vsub.f32 1.5, %v1416
        %v1418 = vmul.f32 %v1413, %v1417
        %vm1419 = vweird.f32 %v1412
        %vm1420 = vweird.f32 %v1413
        %vm1421 = vmor %vm1419, %vm1420
        %v1422 = vsel %vm1421, %v1413, %v1418
        %v1423 = vmul.f32 %v1406, %v1422
        %v1425 = vperm.slane %v1400, 0
        %v1427 = vmul.f32 %v1423, %v1425
        %v1429 = vperm.slane %v1401, 0
        %v1431 = vadd.f32 %v1427, %v1429
        %1432 = vst.msk [vmem:[%s506] sm:$0xff] %vm519, %v1431
      $region68: #{vit_forward.3} parent=59 // pred_fallthru
        _
      %p1433 = scmp.lt.s32.totalorder %s25, 1
      %s1434 = scalar_select %p1433, %s25, 1
      %s1435 = smul.addr %s1434, 8
      %s1436 = scalar_lea.vmem %s10, %s1435
      // Predicated region
      $region69: #{vit_forward.3} parent=59 // pred_check
        %p1437 = pneg %p301
      $region70: #{vit_forward.3} parent=59 // pred_check_branch
        %1439 = sbr.rel (%p1437) target = $region72
      $region71: #{vit_forward.3} parent=59 // pred_region
        _
      $region72: #{vit_forward.3} parent=59 // pred_fallthru
        _
    $region60: #{vit_forward.3} parent=5 // pred_fallthru
      _
    %p1440 = scmp.le.s32.totalorder 2, %s16
    // Predicated region
    $region73: #{vit_forward.3} parent=5 // pred_check
      %p1441 = pneg %p1440
    $region74: #{vit_forward.3} parent=5 // pred_check_branch
      %1443 = sbr.rel (%p1441) target = $region76
    $region75: #{vit_forward.3} parent=5 // pred_region
      %s1444 = ssub.s32 %s16, 2
      // Predicated region
      $region77: #{vit_forward.3} parent=75 // pred_check
        %p1445 = pneg %p307
      $region78: #{vit_forward.3} parent=75 // pred_check_branch
        %1447 = sbr.rel (%p1445) target = $region80
      $region79: #{vit_forward.3} parent=75 // pred_region
        %p1448 = scmp.lt.s32.totalorder %s27, 1
        %s1449 = scalar_select %p1448, %s27, 1
        %s1450 = smul.addr %s1449, 8
        %s1451 = scalar_lea.vmem %s10, %s1450
      $region80: #{vit_forward.3} parent=75 // pred_fallthru
        _
    $region76: #{vit_forward.3} parent=5 // pred_fallthru
      _
  $region6: #{vit_forward.3} parent=0 // loop_footer
    %s20 = sadd.s32 1, %s16
  $region7: #{vit_forward.3} parent=0 // loop_footer_branch
    %15 = sbr.rel target = $region3
  $region8: #{vit_forward.3} parent=0 // loop_exit
    _

</llo_original>
